<compile_context>
chip_gen: v5e
topology: v5e:2x2
jax: 0.10.0
libtpu: 0.0.40
codegen_flags: <defaults>
</compile_context>

<pallas_src>
import jax
import jax.numpy as jnp
from jax import lax
from jax.experimental import pallas as pl
from jax.experimental.pallas import tpu as pltpu

_BN_EPS = 1e-5
_INV_SQRT2 = 0.7071067811865476


def _gelu(x):
    # exact (erf-based) GELU, matching torch.nn.GELU() default; kept in f32
    return 0.5 * x * (1.0 + lax.erf(x * _INV_SQRT2))


def _bn_train(x2, gamma, beta):
    # BatchNorm1d training-mode semantics: per-channel stats over (batch*length),
    # biased variance, eps=1e-5.  Single pass via E[x^2] - E[x]^2.
    inv_n = 1.0 / x2.shape[0]
    mean = jnp.sum(x2, axis=0, keepdims=True) * inv_n
    ex2 = jnp.sum(x2 * x2, axis=0, keepdims=True) * inv_n
    var = jnp.maximum(ex2 - mean * mean, 0.0)
    return (x2 - mean) * lax.rsqrt(var + _BN_EPS) * gamma + beta


def _conv_same(xp_ref, w_ref, B, L, Cin, Cout, K):
    """'same' Conv1d over the zero-haloed padded scratch xp (B, L+K-1, Cin).

    w: (K*Cin, Cout) bf16 (im2col layout, tap-major).  Returns f32 (B*L, Cout).
    """
    if Cin % 128 == 0:
        # im2col: single MXU matmul, contraction K*Cin (>=256 helps v6e/v7x depth)
        lhs = jnp.concatenate([xp_ref[:, k:k + L, :] for k in range(K)], axis=-1)
        lhs = lhs.reshape(B * L, K * Cin).astype(jnp.bfloat16)
        return jnp.dot(lhs, w_ref[...], preferred_element_type=jnp.float32)
    # tiny Cin (e.g. in_chans): per-tap matmuls (avoids non-lane-aligned concat)
    acc = jnp.zeros((B * L, Cout), jnp.float32)
    for k in range(K):
        lhs = xp_ref[:, k:k + L, :].reshape(B * L, Cin).astype(jnp.bfloat16)
        acc = acc + jnp.dot(lhs, w_ref[k * Cin:(k + 1) * Cin, :],
                            preferred_element_type=jnp.float32)
    return acc


# ----------------------------- Pallas kernels ------------------------------ #

def conv_gelu_bn_kernel(x_ref, w_ref, b_ref, g_ref, beta_ref, o_ref, xp_ref):
    """dim_mapping: Conv1d(Cin->Cout, K, 'same') + GELU + BatchNorm1d (train mode)."""
    B, L, Cout = o_ref.shape
    Cin = x_ref.shape[-1]
    K = xp_ref.shape[1] - L + 1
    pad_left = (K - 1) // 2
    # in-kernel 'same' padding: zero halo, copy input into the interior
    xp_ref[...] = jnp.zeros_like(xp_ref)
    xp_ref[:, pad_left:pad_left + L, :] = x_ref[...]
    acc = _conv_same(xp_ref, w_ref, B, L, Cin, Cout, K) + b_ref[...]
    acc = _bn_train(_gelu(acc), g_ref[...], beta_ref[...])
    o_ref[...] = acc.reshape(B, L, Cout)


def conv_kernel(x_ref, w_ref, b_ref, o_ref, xp_ref):
    """Plain Conv1d(Cin->Cout, K, 'same') (encoder2decoder / decoding)."""
    B, L, Cout = o_ref.shape
    Cin = x_ref.shape[-1]
    K = xp_ref.shape[1] - L + 1
    pad_left = (K - 1) // 2
    xp_ref[...] = jnp.zeros_like(xp_ref)
    xp_ref[:, pad_left:pad_left + L, :] = x_ref[...]
    acc = _conv_same(xp_ref, w_ref, B, L, Cin, Cout, K) + b_ref[...]
    o_ref[...] = acc.reshape(B, L, Cout)


def convmixer_stack_kernel(x_ref, dw_w_ref, dw_b_ref, g1_ref, b1_ref,
                           pw_w_ref, pw_b_ref, g2_ref, b2_ref, o_ref, xp_ref):
    """All ConvMixer blocks of one stack, fused: grid axis 0 = block index.

    Per block: Residual(depthwise Conv1d 'same' -> GELU -> BN) -> 1x1 Conv -> GELU -> BN.
    The activation stays resident in the padded VMEM scratch xp across blocks.
    """
    d = pl.program_id(0)
    last = pl.num_programs(0) - 1
    B, L, C = o_ref.shape
    K = dw_w_ref.shape[0]
    pad_left = (K - 1) // 2

    @pl.when(d == 0)
    def _():
        # initialise the padded scratch once: zero halo + copy the stack input
        xp_ref[...] = jnp.zeros_like(xp_ref)
        xp_ref[:, pad_left:pad_left + L, :] = x_ref[...]

    x2 = xp_ref[:, pad_left:pad_left + L, :].reshape(B * L, C)   # residual input

    # depthwise 'same' conv (groups=C): ref-sliced shift-MAC on the VPU, f32
    y3 = xp_ref[:, 0:L, :] * dw_w_ref[0].reshape(1, 1, C)
    for k in range(1, K):
        y3 = y3 + xp_ref[:, k:k + L, :] * dw_w_ref[k].reshape(1, 1, C)

    y2 = _bn_train(_gelu(y3.reshape(B * L, C) + dw_b_ref[...]), g1_ref[...], b1_ref[...])
    y2 = y2 + x2                                                  # Residual()

    # pointwise (kernel_size=1) conv == channel matmul on the MXU (bf16 in, f32 acc)
    z2 = jnp.dot(y2.astype(jnp.bfloat16), pw_w_ref[...],
                 preferred_element_type=jnp.float32) + pw_b_ref[...]
    z2 = _bn_train(_gelu(z2), g2_ref[...], b2_ref[...])
    z3 = z2.reshape(B, L, C)

    @pl.when(d != last)
    def _():
        xp_ref[:, pad_left:pad_left + L, :] = z3   # next block's input stays in VMEM

    @pl.when(d == last)
    def _():
        o_ref[...] = z3


# ------------------------------ JAX wrappers -------------------------------- #

def _vmem_limit(nbytes):
    # scoped-VMEM budget sized to the actual buffers (double-buffer + headroom),
    # capped at 48 MiB so it also fits within v7x's 64 MiB physical VMEM.
    return int(min(max(2 * nbytes + (8 << 20), 16 << 20), 48 << 20))


def _conv_call(kernel, x, w, b, extra=()):
    B, L, Cin = x.shape
    Cout = w.shape[-1]
    K = w.shape[0] // Cin
    args = (x, w, b) + tuple(extra)
    nbytes = sum(int(a.size) * a.dtype.itemsize for a in args)
    nbytes += B * L * Cout * 4 + B * (L + K - 1) * Cin * 4      # output + padded scratch
    return pl.pallas_call(
        kernel,
        out_shape=jax.ShapeDtypeStruct((B, L, Cout), jnp.float32),
        in_specs=[pl.BlockSpec(memory_space=pltpu.MemorySpace.VMEM)] * len(args),
        out_specs=pl.BlockSpec(memory_space=pltpu.MemorySpace.VMEM),
        scratch_shapes=[pltpu.VMEM((B, L + K - 1, Cin), jnp.float32)],
        compiler_params=pltpu.CompilerParams(vmem_limit_bytes=_vmem_limit(nbytes)),
    )(*args)


def _convmixer_stack(x, p):
    B, L, C = x.shape
    depth, K, _ = p['dw_w'].shape
    full = lambda d: (0, 0, 0)          # resident input / output block
    blk = lambda d: (d, 0, 0)           # per-block streamed weights
    per_c = pl.BlockSpec((None, 1, C), blk)

    nbytes = (3 * B * L * C * 4                                  # in + out + live temps
              + B * (L + K - 1) * C * 4                          # padded activation scratch
              + 2 * (K * C * 4 + C * C * 2 + 7 * C * 4))         # double-buffered weights

    return pl.pallas_call(
        convmixer_stack_kernel,
        out_shape=jax.ShapeDtypeStruct((B, L, C), jnp.float32),
        grid_spec=pltpu.PrefetchScalarGridSpec(
            num_scalar_prefetch=0,
            grid=(depth,),
            in_specs=[
                pl.BlockSpec((B, L, C), full),        # stack input (resident)
                pl.BlockSpec((None, K, C), blk),      # depthwise weight   (K, C)
                per_c, per_c, per_c,                  # dw bias, BN1 gamma/beta
                pl.BlockSpec((None, C, C), blk),      # pointwise weight   (C, C) bf16
                per_c, per_c, per_c,                  # pw bias, BN2 gamma/beta
            ],
            out_specs=pl.BlockSpec((B, L, C), full),
            scratch_shapes=[pltpu.VMEM((B, L + K - 1, C), jnp.float32)],
        ),
        compiler_params=pltpu.CompilerParams(
            dimension_semantics=("arbitrary",),       # sequential dependence across blocks
            vmem_limit_bytes=_vmem_limit(nbytes),
        ),
    )(x, p['dw_w'], p['dw_b'], p['g1'], p['b1'],
      p['pw_w'], p['pw_b'], p['g2'], p['b2'])


def init_params(key, *, in_chans=1, kernel_size=3, patch_size=3, embed_dim=512,
                depth=4, decoder_embed_dim=512, decoder_depth=8):
    # Matches _init_weights: Conv1d / BatchNorm1d weights ~ N(0, 0.02), biases = 0.
    kit = iter(jax.random.split(key, 16))
    nrm = lambda shape: 0.02 * jax.random.normal(next(kit), shape, jnp.float32)
    zeros = lambda shape: jnp.zeros(shape, jnp.float32)

    def conv_w(k, cin, cout):
        # Conv1d weight stored in im2col layout (K, Cin, Cout) -> (K*Cin, Cout), bf16 for MXU
        return nrm((k, cin, cout)).reshape(k * cin, cout).astype(jnp.bfloat16)

    def stack_params(dim, n):
        return {
            'dw_w': nrm((n, kernel_size, dim)),                  # depthwise weight (depth, K, C), f32
            'dw_b': zeros((n, 1, dim)),
            'g1': nrm((n, 1, dim)),
            'b1': zeros((n, 1, dim)),
            'pw_w': nrm((n, dim, dim)).astype(jnp.bfloat16),     # 1x1 conv weight (Cin, Cout), bf16
            'pw_b': zeros((n, 1, dim)),
            'g2': nrm((n, 1, dim)),
            'b2': zeros((n, 1, dim)),
        }

    return {
        'dm_w': conv_w(patch_size, in_chans, embed_dim),
        'dm_b': zeros((1, embed_dim)),
        'dm_g': nrm((1, embed_dim)),
        'dm_beta': zeros((1, embed_dim)),
        'enc': stack_params(embed_dim, depth),
        'e2d_w': conv_w(kernel_size, embed_dim, decoder_embed_dim),
        'e2d_b': zeros((1, decoder_embed_dim)),
        'dec': stack_params(decoder_embed_dim, decoder_depth),
        'out_w': conv_w(kernel_size, decoder_embed_dim, in_chans),
        'out_b': zeros((1, in_chans)),
    }


def convmixer_autoencoder_forward(imgs, params):
    """imgs: (B, in_chans, L) float32 (PyTorch NCL).  Returns (B, in_chans, L)."""
    x = jnp.transpose(imgs, (0, 2, 1)).astype(jnp.float32)       # channels-last (B, L, C)

    # dim_mapping: Conv1d(in_chans -> embed_dim, patch_size, 'same') + GELU + BN
    x = _conv_call(conv_gelu_bn_kernel, x, params['dm_w'], params['dm_b'],
                   extra=(params['dm_g'], params['dm_beta']))

    # encoder ConvMixer: all `depth` blocks fused in one pallas_call
    x = _convmixer_stack(x, params['enc'])

    # encoder2decoder: Conv1d(embed_dim -> decoder_embed_dim, kernel_size, 'same')
    x = _conv_call(conv_kernel, x, params['e2d_w'], params['e2d_b'])

    # decoder ConvMixer: all `decoder_depth` blocks fused in one pallas_call
    x = _convmixer_stack(x, params['dec'])

    # decoding: Conv1d(decoder_embed_dim -> in_chans, kernel_size, 'same')
    x = _conv_call(conv_kernel, x, params['out_w'], params['out_b'])

    return jnp.transpose(x, (0, 2, 1))                           # back to NCL

# TODO(synk): BatchNorm running-statistics updates (training-mode side effect that does
# not affect the forward output) are not reproduced.


if __name__ == "__main__":
    # Small shapes consistent with the module (scaled-down embed_dim / depths).
    B, IN_CHANS, L = 2, 4, 16
    PATCH, KSIZE = 3, 3
    EMBED, DEPTH = 128, 2
    DEC_EMBED, DEC_DEPTH = 128, 2

    key = jax.random.PRNGKey(0)
    k_x, k_p = jax.random.split(key)
    imgs = jax.random.normal(k_x, (B, IN_CHANS, L), jnp.float32)
    params = init_params(k_p, in_chans=IN_CHANS, kernel_size=KSIZE, patch_size=PATCH,
                         embed_dim=EMBED, depth=DEPTH,
                         decoder_embed_dim=DEC_EMBED, decoder_depth=DEC_DEPTH)

    fwd = jax.jit(convmixer_autoencoder_forward)
    out = jax.block_until_ready(fwd(imgs, params))
    assert out.shape == (B, IN_CHANS, L), out.shape
    assert bool(jnp.all(jnp.isfinite(out)))
    print("KERNEL_OK")
</pallas_src>

<mosaic_0001>
module attributes {stable_mosaic.version = 11 : i64} {
  func.func @conv_gelu_bn_kernel(%arg0: memref<2x16x4xf32, #tpu.memory_space<vmem>>, %arg1: memref<12x128xbf16, #tpu.memory_space<vmem>>, %arg2: memref<1x128xf32, #tpu.memory_space<vmem>>, %arg3: memref<1x128xf32, #tpu.memory_space<vmem>>, %arg4: memref<1x128xf32, #tpu.memory_space<vmem>>, %arg5: memref<2x16x128xf32, #tpu.memory_space<vmem>>, %arg6: memref<2x18x4xf32, #tpu.memory_space<vmem>>) attributes {dimension_semantics = [], scalar_prefetch = 0 : i64, scratch_operands = 1 : i64, tpu.core_type = #tpu.core_type<tc>} {
    %cst = arith.constant 0.000000e+00 : f32
    %0 = vector.broadcast %cst : f32 to vector<2x18x4xf32>
    %c0 = arith.constant 0 : index
    %c0_0 = arith.constant 0 : index
    %c0_1 = arith.constant 0 : index
    %1 = vector.load %arg6[%c0, %c0_0, %c0_1] : memref<2x18x4xf32, #tpu.memory_space<vmem>>, vector<2x18x4xf32>
    tpu.vector_store %arg6[%c0, %c0_0, %c0_1], %0 {strides = array<i32>} : memref<2x18x4xf32, #tpu.memory_space<vmem>>, vector<2x18x4xf32>,
    %c0_2 = arith.constant 0 : index
    %c0_3 = arith.constant 0 : index
    %c0_4 = arith.constant 0 : index
    %2 = vector.load %arg0[%c0_2, %c0_3, %c0_4] : memref<2x16x4xf32, #tpu.memory_space<vmem>>, vector<2x16x4xf32>
    %c0_5 = arith.constant 0 : index
    %c1 = arith.constant 1 : index
    %c0_6 = arith.constant 0 : index
    %3 = vector.load %arg6[%c0_5, %c1, %c0_6] : memref<2x18x4xf32, #tpu.memory_space<vmem>>, vector<2x16x4xf32>
    tpu.vector_store %arg6[%c0_5, %c1, %c0_6], %2 {strides = array<i32>} : memref<2x18x4xf32, #tpu.memory_space<vmem>>, vector<2x16x4xf32>,
    %cst_7 = arith.constant 0.000000e+00 : f32
    %4 = vector.broadcast %cst_7 : f32 to vector<32x128xf32>
    %c0_8 = arith.constant 0 : index
    %c0_9 = arith.constant 0 : index
    %c0_10 = arith.constant 0 : index
    %5 = vector.load %arg6[%c0_8, %c0_9, %c0_10] : memref<2x18x4xf32, #tpu.memory_space<vmem>>, vector<2x16x4xf32>
    %6 = vector.shape_cast %5 : vector<2x16x4xf32> to vector<32x4xf32>
    %7 = arith.truncf %6 : vector<32x4xf32> to vector<32x4xbf16>
    %c0_11 = arith.constant 0 : index
    %c0_12 = arith.constant 0 : index
    %8 = vector.load %arg1[%c0_11, %c0_12] : memref<12x128xbf16, #tpu.memory_space<vmem>>, vector<4x128xbf16>
    %cst_13 = arith.constant dense<0.000000e+00> : vector<32x128xf32>
    %9 = tpu.matmul %7, %8, %cst_13 {dimension_numbers = #tpu.dot_dimension_numbers<[1], [0], [0], [1], [0, 0, 1, 1], [], []>} : vector<32x4xbf16>, vector<4x128xbf16>, vector<32x128xf32> -> vector<32x128xf32>
    %10 = arith.addf %4, %9 : vector<32x128xf32>
    %c0_14 = arith.constant 0 : index
    %c1_15 = arith.constant 1 : index
    %c0_16 = arith.constant 0 : index
    %11 = vector.load %arg6[%c0_14, %c1_15, %c0_16] : memref<2x18x4xf32, #tpu.memory_space<vmem>>, vector<2x16x4xf32>
    %12 = vector.shape_cast %11 : vector<2x16x4xf32> to vector<32x4xf32>
    %13 = arith.truncf %12 : vector<32x4xf32> to vector<32x4xbf16>
    %c4 = arith.constant 4 : index
    %c0_17 = arith.constant 0 : index
    %14 = vector.load %arg1[%c4, %c0_17] : memref<12x128xbf16, #tpu.memory_space<vmem>>, vector<4x128xbf16>
    %cst_18 = arith.constant dense<0.000000e+00> : vector<32x128xf32>
    %15 = tpu.matmul %13, %14, %cst_18 {dimension_numbers = #tpu.dot_dimension_numbers<[1], [0], [0], [1], [0, 0, 1, 1], [], []>} : vector<32x4xbf16>, vector<4x128xbf16>, vector<32x128xf32> -> vector<32x128xf32>
    %16 = arith.addf %10, %15 : vector<32x128xf32>
    %c0_19 = arith.constant 0 : index
    %c2 = arith.constant 2 : index
    %c0_20 = arith.constant 0 : index
    %17 = vector.load %arg6[%c0_19, %c2, %c0_20] : memref<2x18x4xf32, #tpu.memory_space<vmem>>, vector<2x16x4xf32>
    %18 = vector.shape_cast %17 : vector<2x16x4xf32> to vector<32x4xf32>
    %19 = arith.truncf %18 : vector<32x4xf32> to vector<32x4xbf16>
    %c8 = arith.constant 8 : index
    %c0_21 = arith.constant 0 : index
    %20 = vector.load %arg1[%c8, %c0_21] : memref<12x128xbf16, #tpu.memory_space<vmem>>, vector<4x128xbf16>
    %cst_22 = arith.constant dense<0.000000e+00> : vector<32x128xf32>
    %21 = tpu.matmul %19, %20, %cst_22 {dimension_numbers = #tpu.dot_dimension_numbers<[1], [0], [0], [1], [0, 0, 1, 1], [], []>} : vector<32x4xbf16>, vector<4x128xbf16>, vector<32x128xf32> -> vector<32x128xf32>
    %22 = arith.addf %16, %21 : vector<32x128xf32>
    %c0_23 = arith.constant 0 : index
    %c0_24 = arith.constant 0 : index
    %23 = vector.load %arg2[%c0_23, %c0_24] : memref<1x128xf32, #tpu.memory_space<vmem>>, vector<1x128xf32>
    %24 = vector.broadcast %23 : vector<1x128xf32> to vector<32x128xf32>
    %25 = arith.addf %22, %24 : vector<32x128xf32>
    %cst_25 = arith.constant 5.000000e-01 : f32
    %26 = vector.broadcast %cst_25 : f32 to vector<32x128xf32>
    %27 = arith.mulf %26, %25 : vector<32x128xf32>
    %cst_26 = arith.constant 0.707106769 : f32
    %28 = vector.broadcast %cst_26 : f32 to vector<32x128xf32>
    %29 = arith.mulf %25, %28 : vector<32x128xf32>
    %30 = math.erf %29 : vector<32x128xf32>
    %cst_27 = arith.constant 1.000000e+00 : f32
    %31 = vector.broadcast %cst_27 : f32 to vector<32x128xf32>
    %32 = arith.addf %31, %30 : vector<32x128xf32>
    %33 = arith.mulf %27, %32 : vector<32x128xf32>
    %c0_28 = arith.constant 0 : index
    %c0_29 = arith.constant 0 : index
    %34 = vector.load %arg3[%c0_28, %c0_29] : memref<1x128xf32, #tpu.memory_space<vmem>>, vector<1x128xf32>
    %c0_30 = arith.constant 0 : index
    %c0_31 = arith.constant 0 : index
    %35 = vector.load %arg4[%c0_30, %c0_31] : memref<1x128xf32, #tpu.memory_space<vmem>>, vector<1x128xf32>
    %cst_32 = arith.constant dense<0.000000e+00> : vector<128xf32>
    %36 = vector.multi_reduction <add>, %33, %cst_32 [0] : vector<32x128xf32> to vector<128xf32>
    %37 = vector.shape_cast %36 : vector<128xf32> to vector<1x128xf32>
    %cst_33 = arith.constant 3.125000e-02 : f32
    %38 = vector.broadcast %cst_33 : f32 to vector<1x128xf32>
    %39 = arith.mulf %37, %38 : vector<1x128xf32>
    %40 = arith.mulf %33, %33 : vector<32x128xf32>
    %cst_34 = arith.constant dense<0.000000e+00> : vector<128xf32>
    %41 = vector.multi_reduction <add>, %40, %cst_34 [0] : vector<32x128xf32> to vector<128xf32>
    %42 = vector.shape_cast %41 : vector<128xf32> to vector<1x128xf32>
    %cst_35 = arith.constant 3.125000e-02 : f32
    %43 = vector.broadcast %cst_35 : f32 to vector<1x128xf32>
    %44 = arith.mulf %42, %43 : vector<1x128xf32>
    %45 = arith.mulf %39, %39 : vector<1x128xf32>
    %46 = arith.subf %44, %45 : vector<1x128xf32>
    %cst_36 = arith.constant 0.000000e+00 : f32
    %47 = vector.broadcast %cst_36 : f32 to vector<1x128xf32>
    %48 = arith.maximumf %46, %47 : vector<1x128xf32>
    %49 = vector.broadcast %39 : vector<1x128xf32> to vector<32x128xf32>
    %50 = arith.subf %33, %49 : vector<32x128xf32>
    %cst_37 = arith.constant 9.99999974E-6 : f32
    %51 = vector.broadcast %cst_37 : f32 to vector<1x128xf32>
    %52 = arith.addf %48, %51 : vector<1x128xf32>
    %53 = math.rsqrt %52 : vector<1x128xf32>
    %54 = vector.broadcast %53 : vector<1x128xf32> to vector<32x128xf32>
    %55 = arith.mulf %50, %54 : vector<32x128xf32>
    %56 = vector.broadcast %34 : vector<1x128xf32> to vector<32x128xf32>
    %57 = arith.mulf %55, %56 : vector<32x128xf32>
    %58 = vector.broadcast %35 : vector<1x128xf32> to vector<32x128xf32>
    %59 = arith.addf %57, %58 : vector<32x128xf32>
    %60 = vector.shape_cast %59 : vector<32x128xf32> to vector<2x16x128xf32>
    %c0_38 = arith.constant 0 : index
    %c0_39 = arith.constant 0 : index
    %c0_40 = arith.constant 0 : index
    %61 = vector.load %arg5[%c0_38, %c0_39, %c0_40] : memref<2x16x128xf32, #tpu.memory_space<vmem>>, vector<2x16x128xf32>
    tpu.vector_store %arg5[%c0_38, %c0_39, %c0_40], %60 {strides = array<i32>} : memref<2x16x128xf32, #tpu.memory_space<vmem>>, vector<2x16x128xf32>,
    return
  }
}

module attributes {stable_mosaic.version = 11 : i64} {
  func.func @conv_kernel(%arg0: memref<2x16x128xf32, #tpu.memory_space<vmem>>, %arg1: memref<384x128xbf16, #tpu.memory_space<vmem>>, %arg2: memref<1x128xf32, #tpu.memory_space<vmem>>, %arg3: memref<2x16x128xf32, #tpu.memory_space<vmem>>, %arg4: memref<2x18x128xf32, #tpu.memory_space<vmem>>) attributes {dimension_semantics = [], scalar_prefetch = 0 : i64, scratch_operands = 1 : i64, tpu.core_type = #tpu.core_type<tc>} {
    %cst = arith.constant 0.000000e+00 : f32
    %0 = vector.broadcast %cst : f32 to vector<2x18x128xf32>
    %c0 = arith.constant 0 : index
    %c0_0 = arith.constant 0 : index
    %c0_1 = arith.constant 0 : index
    %1 = vector.load %arg4[%c0, %c0_0, %c0_1] : memref<2x18x128xf32, #tpu.memory_space<vmem>>, vector<2x18x128xf32>
    tpu.vector_store %arg4[%c0, %c0_0, %c0_1], %0 {strides = array<i32>} : memref<2x18x128xf32, #tpu.memory_space<vmem>>, vector<2x18x128xf32>,
    %c0_2 = arith.constant 0 : index
    %c0_3 = arith.constant 0 : index
    %c0_4 = arith.constant 0 : index
    %2 = vector.load %arg0[%c0_2, %c0_3, %c0_4] : memref<2x16x128xf32, #tpu.memory_space<vmem>>, vector<2x16x128xf32>
    %c0_5 = arith.constant 0 : index
    %c1 = arith.constant 1 : index
    %c0_6 = arith.constant 0 : index
    %3 = vector.load %arg4[%c0_5, %c1, %c0_6] : memref<2x18x128xf32, #tpu.memory_space<vmem>>, vector<2x16x128xf32>
    tpu.vector_store %arg4[%c0_5, %c1, %c0_6], %2 {strides = array<i32>} : memref<2x18x128xf32, #tpu.memory_space<vmem>>, vector<2x16x128xf32>,
    %c0_7 = arith.constant 0 : index
    %c0_8 = arith.constant 0 : index
    %c0_9 = arith.constant 0 : index
    %4 = vector.load %arg4[%c0_7, %c0_8, %c0_9] : memref<2x18x128xf32, #tpu.memory_space<vmem>>, vector<2x16x128xf32>
    %c0_10 = arith.constant 0 : index
    %c1_11 = arith.constant 1 : index
    %c0_12 = arith.constant 0 : index
    %5 = vector.load %arg4[%c0_10, %c1_11, %c0_12] : memref<2x18x128xf32, #tpu.memory_space<vmem>>, vector<2x16x128xf32>
    %c0_13 = arith.constant 0 : index
    %c2 = arith.constant 2 : index
    %c0_14 = arith.constant 0 : index
    %6 = vector.load %arg4[%c0_13, %c2, %c0_14] : memref<2x18x128xf32, #tpu.memory_space<vmem>>, vector<2x16x128xf32>
    %7 = tpu.concatenate %4, %5, %6 in 2 : vector<2x16x128xf32>, vector<2x16x128xf32>, vector<2x16x128xf32> -> vector<2x16x384xf32>
    %8 = vector.shape_cast %7 : vector<2x16x384xf32> to vector<32x384xf32>
    %9 = arith.truncf %8 : vector<32x384xf32> to vector<32x384xbf16>
    %c0_15 = arith.constant 0 : index
    %c0_16 = arith.constant 0 : index
    %10 = vector.load %arg1[%c0_15, %c0_16] : memref<384x128xbf16, #tpu.memory_space<vmem>>, vector<384x128xbf16>
    %cst_17 = arith.constant dense<0.000000e+00> : vector<32x128xf32>
    %11 = tpu.matmul %9, %10, %cst_17 {dimension_numbers = #tpu.dot_dimension_numbers<[1], [0], [0], [1], [0, 0, 1, 1], [], []>} : vector<32x384xbf16>, vector<384x128xbf16>, vector<32x128xf32> -> vector<32x128xf32>
    %c0_18 = arith.constant 0 : index
    %c0_19 = arith.constant 0 : index
    %12 = vector.load %arg2[%c0_18, %c0_19] : memref<1x128xf32, #tpu.memory_space<vmem>>, vector<1x128xf32>
    %13 = vector.broadcast %12 : vector<1x128xf32> to vector<32x128xf32>
    %14 = arith.addf %11, %13 : vector<32x128xf32>
    %15 = vector.shape_cast %14 : vector<32x128xf32> to vector<2x16x128xf32>
    %c0_20 = arith.constant 0 : index
    %c0_21 = arith.constant 0 : index
    %c0_22 = arith.constant 0 : index
    %16 = vector.load %arg3[%c0_20, %c0_21, %c0_22] : memref<2x16x128xf32, #tpu.memory_space<vmem>>, vector<2x16x128xf32>
    tpu.vector_store %arg3[%c0_20, %c0_21, %c0_22], %15 {strides = array<i32>} : memref<2x16x128xf32, #tpu.memory_space<vmem>>, vector<2x16x128xf32>,
    return
  }
}

module attributes {stable_mosaic.version = 11 : i64} {
  func.func @convmixer_stack_kernel(%arg0: i32, %arg1: memref<2x16x128xf32, #tpu.memory_space<vmem>>, %arg2: memref<1x3x128xf32, #tpu.memory_space<vmem>>, %arg3: memref<1x1x128xf32, #tpu.memory_space<vmem>>, %arg4: memref<1x1x128xf32, #tpu.memory_space<vmem>>, %arg5: memref<1x1x128xf32, #tpu.memory_space<vmem>>, %arg6: memref<1x128x128xbf16, #tpu.memory_space<vmem>>, %arg7: memref<1x1x128xf32, #tpu.memory_space<vmem>>, %arg8: memref<1x1x128xf32, #tpu.memory_space<vmem>>, %arg9: memref<1x1x128xf32, #tpu.memory_space<vmem>>, %arg10: memref<2x16x128xf32, #tpu.memory_space<vmem>>, %arg11: memref<2x18x128xf32, #tpu.memory_space<vmem>>) attributes {dimension_semantics = [#tpu.dimension_semantics<arbitrary>], iteration_bounds = array<i64: 2>, scalar_prefetch = 0 : i64, scratch_operands = 1 : i64, tpu.core_type = #tpu.core_type<tc>, window_params = [{pipeline_mode = #tpu.pipeline_mode<synchronous>, transform_indices = @transform_0, window_bounds = array<i64: 2, 16, 128>}, {transform_indices = @transform_1, window_bounds = array<i64: 1, 3, 128>}, {transform_indices = @transform_2, window_bounds = array<i64: 1, 1, 128>}, {transform_indices = @transform_3, window_bounds = array<i64: 1, 1, 128>}, {transform_indices = @transform_4, window_bounds = array<i64: 1, 1, 128>}, {transform_indices = @transform_5, window_bounds = array<i64: 1, 128, 128>}, {transform_indices = @transform_6, window_bounds = array<i64: 1, 1, 128>}, {transform_indices = @transform_7, window_bounds = array<i64: 1, 1, 128>}, {transform_indices = @transform_8, window_bounds = array<i64: 1, 1, 128>}, {pipeline_mode = #tpu.pipeline_mode<synchronous>, transform_indices = @transform_9, window_bounds = array<i64: 2, 16, 128>}]} {
    %c0_i32 = arith.constant 0 : i32
    %0 = arith.cmpi eq, %arg0, %c0_i32 : i32
    %1 = arith.extui %0 : i1 to i32
    %c0_i32_0 = arith.constant 0 : i32
    %2 = arith.cmpi ne, %1, %c0_i32_0 : i32
    scf.if %2 {
      %cst_61 = arith.constant 0.000000e+00 : f32
      %118 = vector.broadcast %cst_61 : f32 to vector<2x18x128xf32>
      %c0_62 = arith.constant 0 : index
      %c0_63 = arith.constant 0 : index
      %c0_64 = arith.constant 0 : index
      %119 = vector.load %arg11[%c0_62, %c0_63, %c0_64] : memref<2x18x128xf32, #tpu.memory_space<vmem>>, vector<2x18x128xf32>
      tpu.vector_store %arg11[%c0_62, %c0_63, %c0_64], %118 {strides = array<i32>} : memref<2x18x128xf32, #tpu.memory_space<vmem>>, vector<2x18x128xf32>,
      %c0_65 = arith.constant 0 : index
      %c0_66 = arith.constant 0 : index
      %c0_67 = arith.constant 0 : index
      %120 = vector.load %arg1[%c0_65, %c0_66, %c0_67] : memref<2x16x128xf32, #tpu.memory_space<vmem>>, vector<2x16x128xf32>
      %c0_68 = arith.constant 0 : index
      %c1_69 = arith.constant 1 : index
      %c0_70 = arith.constant 0 : index
      %121 = vector.load %arg11[%c0_68, %c1_69, %c0_70] : memref<2x18x128xf32, #tpu.memory_space<vmem>>, vector<2x16x128xf32>
      tpu.vector_store %arg11[%c0_68, %c1_69, %c0_70], %120 {strides = array<i32>} : memref<2x18x128xf32, #tpu.memory_space<vmem>>, vector<2x16x128xf32>,
    } else {
    }
    %c0 = arith.constant 0 : index
    %c1 = arith.constant 1 : index
    %c0_1 = arith.constant 0 : index
    %3 = vector.load %arg11[%c0, %c1, %c0_1] : memref<2x18x128xf32, #tpu.memory_space<vmem>>, vector<2x16x128xf32>
    %4 = vector.shape_cast %3 : vector<2x16x128xf32> to vector<32x128xf32>
    %c0_2 = arith.constant 0 : index
    %c0_3 = arith.constant 0 : index
    %c0_4 = arith.constant 0 : index
    %5 = vector.load %arg11[%c0_2, %c0_3, %c0_4] : memref<2x18x128xf32, #tpu.memory_space<vmem>>, vector<2x16x128xf32>
    %c0_5 = arith.constant 0 : index
    %c0_6 = arith.constant 0 : index
    %c0_7 = arith.constant 0 : index
    %6 = vector.load %arg2[%c0_5, %c0_6, %c0_7] : memref<1x3x128xf32, #tpu.memory_space<vmem>>, vector<1x1x128xf32>
    %7 = vector.shape_cast %6 : vector<1x1x128xf32> to vector<128xf32>
    %8 = vector.shape_cast %7 : vector<128xf32> to vector<1x1x128xf32>
    %9 = vector.broadcast %8 : vector<1x1x128xf32> to vector<2x16x128xf32>
    %10 = arith.mulf %5, %9 : vector<2x16x128xf32>
    %c0_8 = arith.constant 0 : index
    %c1_9 = arith.constant 1 : index
    %c0_10 = arith.constant 0 : index
    %11 = vector.load %arg11[%c0_8, %c1_9, %c0_10] : memref<2x18x128xf32, #tpu.memory_space<vmem>>, vector<2x16x128xf32>
    %c0_11 = arith.constant 0 : index
    %c1_12 = arith.constant 1 : index
    %c0_13 = arith.constant 0 : index
    %12 = vector.load %arg2[%c0_11, %c1_12, %c0_13] : memref<1x3x128xf32, #tpu.memory_space<vmem>>, vector<1x1x128xf32>
    %13 = vector.shape_cast %12 : vector<1x1x128xf32> to vector<128xf32>
    %14 = vector.shape_cast %13 : vector<128xf32> to vector<1x1x128xf32>
    %15 = vector.broadcast %14 : vector<1x1x128xf32> to vector<2x16x128xf32>
    %16 = arith.mulf %11, %15 : vector<2x16x128xf32>
    %17 = arith.addf %10, %16 : vector<2x16x128xf32>
    %c0_14 = arith.constant 0 : index
    %c2 = arith.constant 2 : index
    %c0_15 = arith.constant 0 : index
    %18 = vector.load %arg11[%c0_14, %c2, %c0_15] : memref<2x18x128xf32, #tpu.memory_space<vmem>>, vector<2x16x128xf32>
    %c0_16 = arith.constant 0 : index
    %c2_17 = arith.constant 2 : index
    %c0_18 = arith.constant 0 : index
    %19 = vector.load %arg2[%c0_16, %c2_17, %c0_18] : memref<1x3x128xf32, #tpu.memory_space<vmem>>, vector<1x1x128xf32>
    %20 = vector.shape_cast %19 : vector<1x1x128xf32> to vector<128xf32>
    %21 = vector.shape_cast %20 : vector<128xf32> to vector<1x1x128xf32>
    %22 = vector.broadcast %21 : vector<1x1x128xf32> to vector<2x16x128xf32>
    %23 = arith.mulf %18, %22 : vector<2x16x128xf32>
    %24 = arith.addf %17, %23 : vector<2x16x128xf32>
    %25 = vector.shape_cast %24 : vector<2x16x128xf32> to vector<32x128xf32>
    %c0_19 = arith.constant 0 : index
    %c0_20 = arith.constant 0 : index
    %c0_21 = arith.constant 0 : index
    %26 = vector.load %arg3[%c0_19, %c0_20, %c0_21] : memref<1x1x128xf32, #tpu.memory_space<vmem>>, vector<1x1x128xf32>
    %27 = vector.shape_cast %26 : vector<1x1x128xf32> to vector<1x128xf32>
    %28 = vector.broadcast %27 : vector<1x128xf32> to vector<32x128xf32>
    %29 = arith.addf %25, %28 : vector<32x128xf32>
    %cst = arith.constant 5.000000e-01 : f32
    %30 = vector.broadcast %cst : f32 to vector<32x128xf32>
    %31 = arith.mulf %30, %29 : vector<32x128xf32>
    %cst_22 = arith.constant 0.707106769 : f32
    %32 = vector.broadcast %cst_22 : f32 to vector<32x128xf32>
    %33 = arith.mulf %29, %32 : vector<32x128xf32>
    %34 = math.erf %33 : vector<32x128xf32>
    %cst_23 = arith.constant 1.000000e+00 : f32
    %35 = vector.broadcast %cst_23 : f32 to vector<32x128xf32>
    %36 = arith.addf %35, %34 : vector<32x128xf32>
    %37 = arith.mulf %31, %36 : vector<32x128xf32>
    %c0_24 = arith.constant 0 : index
    %c0_25 = arith.constant 0 : index
    %c0_26 = arith.constant 0 : index
    %38 = vector.load %arg4[%c0_24, %c0_25, %c0_26] : memref<1x1x128xf32, #tpu.memory_space<vmem>>, vector<1x1x128xf32>
    %39 = vector.shape_cast %38 : vector<1x1x128xf32> to vector<1x128xf32>
    %c0_27 = arith.constant 0 : index
    %c0_28 = arith.constant 0 : index
    %c0_29 = arith.constant 0 : index
    %40 = vector.load %arg5[%c0_27, %c0_28, %c0_29] : memref<1x1x128xf32, #tpu.memory_space<vmem>>, vector<1x1x128xf32>
    %41 = vector.shape_cast %40 : vector<1x1x128xf32> to vector<1x128xf32>
    %cst_30 = arith.constant dense<0.000000e+00> : vector<128xf32>
    %42 = vector.multi_reduction <add>, %37, %cst_30 [0] : vector<32x128xf32> to vector<128xf32>
    %43 = vector.shape_cast %42 : vector<128xf32> to vector<1x128xf32>
    %cst_31 = arith.constant 3.125000e-02 : f32
    %44 = vector.broadcast %cst_31 : f32 to vector<1x128xf32>
    %45 = arith.mulf %43, %44 : vector<1x128xf32>
    %46 = arith.mulf %37, %37 : vector<32x128xf32>
    %cst_32 = arith.constant dense<0.000000e+00> : vector<128xf32>
    %47 = vector.multi_reduction <add>, %46, %cst_32 [0] : vector<32x128xf32> to vector<128xf32>
    %48 = vector.shape_cast %47 : vector<128xf32> to vector<1x128xf32>
    %cst_33 = arith.constant 3.125000e-02 : f32
    %49 = vector.broadcast %cst_33 : f32 to vector<1x128xf32>
    %50 = arith.mulf %48, %49 : vector<1x128xf32>
    %51 = arith.mulf %45, %45 : vector<1x128xf32>
    %52 = arith.subf %50, %51 : vector<1x128xf32>
    %cst_34 = arith.constant 0.000000e+00 : f32
    %53 = vector.broadcast %cst_34 : f32 to vector<1x128xf32>
    %54 = arith.maximumf %52, %53 : vector<1x128xf32>
    %55 = vector.broadcast %45 : vector<1x128xf32> to vector<32x128xf32>
    %56 = arith.subf %37, %55 : vector<32x128xf32>
    %cst_35 = arith.constant 9.99999974E-6 : f32
    %57 = vector.broadcast %cst_35 : f32 to vector<1x128xf32>
    %58 = arith.addf %54, %57 : vector<1x128xf32>
    %59 = math.rsqrt %58 : vector<1x128xf32>
    %60 = vector.broadcast %59 : vector<1x128xf32> to vector<32x128xf32>
    %61 = arith.mulf %56, %60 : vector<32x128xf32>
    %62 = vector.broadcast %39 : vector<1x128xf32> to vector<32x128xf32>
    %63 = arith.mulf %61, %62 : vector<32x128xf32>
    %64 = vector.broadcast %41 : vector<1x128xf32> to vector<32x128xf32>
    %65 = arith.addf %63, %64 : vector<32x128xf32>
    %66 = arith.addf %65, %4 : vector<32x128xf32>
    %67 = arith.truncf %66 : vector<32x128xf32> to vector<32x128xbf16>
    %c0_36 = arith.constant 0 : index
    %c0_37 = arith.constant 0 : index
    %c0_38 = arith.constant 0 : index
    %68 = vector.load %arg6[%c0_36, %c0_37, %c0_38] : memref<1x128x128xbf16, #tpu.memory_space<vmem>>, vector<1x128x128xbf16>
    %69 = vector.shape_cast %68 : vector<1x128x128xbf16> to vector<128x128xbf16>
    %cst_39 = arith.constant dense<0.000000e+00> : vector<32x128xf32>
    %70 = tpu.matmul %67, %69, %cst_39 {dimension_numbers = #tpu.dot_dimension_numbers<[1], [0], [0], [1], [0, 0, 1, 1], [], []>} : vector<32x128xbf16>, vector<128x128xbf16>, vector<32x128xf32> -> vector<32x128xf32>
    %c0_40 = arith.constant 0 : index
    %c0_41 = arith.constant 0 : index
    %c0_42 = arith.constant 0 : index
    %71 = vector.load %arg7[%c0_40, %c0_41, %c0_42] : memref<1x1x128xf32, #tpu.memory_space<vmem>>, vector<1x1x128xf32>
    %72 = vector.shape_cast %71 : vector<1x1x128xf32> to vector<1x128xf32>
    %73 = vector.broadcast %72 : vector<1x128xf32> to vector<32x128xf32>
    %74 = arith.addf %70, %73 : vector<32x128xf32>
    %cst_43 = arith.constant 5.000000e-01 : f32
    %75 = vector.broadcast %cst_43 : f32 to vector<32x128xf32>
    %76 = arith.mulf %75, %74 : vector<32x128xf32>
    %cst_44 = arith.constant 0.707106769 : f32
    %77 = vector.broadcast %cst_44 : f32 to vector<32x128xf32>
    %78 = arith.mulf %74, %77 : vector<32x128xf32>
    %79 = math.erf %78 : vector<32x128xf32>
    %cst_45 = arith.constant 1.000000e+00 : f32
    %80 = vector.broadcast %cst_45 : f32 to vector<32x128xf32>
    %81 = arith.addf %80, %79 : vector<32x128xf32>
    %82 = arith.mulf %76, %81 : vector<32x128xf32>
    %c0_46 = arith.constant 0 : index
    %c0_47 = arith.constant 0 : index
    %c0_48 = arith.constant 0 : index
    %83 = vector.load %arg8[%c0_46, %c0_47, %c0_48] : memref<1x1x128xf32, #tpu.memory_space<vmem>>, vector<1x1x128xf32>
    %84 = vector.shape_cast %83 : vector<1x1x128xf32> to vector<1x128xf32>
    %c0_49 = arith.constant 0 : index
    %c0_50 = arith.constant 0 : index
    %c0_51 = arith.constant 0 : index
    %85 = vector.load %arg9[%c0_49, %c0_50, %c0_51] : memref<1x1x128xf32, #tpu.memory_space<vmem>>, vector<1x1x128xf32>
    %86 = vector.shape_cast %85 : vector<1x1x128xf32> to vector<1x128xf32>
    %cst_52 = arith.constant dense<0.000000e+00> : vector<128xf32>
    %87 = vector.multi_reduction <add>, %82, %cst_52 [0] : vector<32x128xf32> to vector<128xf32>
    %88 = vector.shape_cast %87 : vector<128xf32> to vector<1x128xf32>
    %cst_53 = arith.constant 3.125000e-02 : f32
    %89 = vector.broadcast %cst_53 : f32 to vector<1x128xf32>
    %90 = arith.mulf %88, %89 : vector<1x128xf32>
    %91 = arith.mulf %82, %82 : vector<32x128xf32>
    %cst_54 = arith.constant dense<0.000000e+00> : vector<128xf32>
    %92 = vector.multi_reduction <add>, %91, %cst_54 [0] : vector<32x128xf32> to vector<128xf32>
    %93 = vector.shape_cast %92 : vector<128xf32> to vector<1x128xf32>
    %cst_55 = arith.constant 3.125000e-02 : f32
    %94 = vector.broadcast %cst_55 : f32 to vector<1x128xf32>
    %95 = arith.mulf %93, %94 : vector<1x128xf32>
    %96 = arith.mulf %90, %90 : vector<1x128xf32>
    %97 = arith.subf %95, %96 : vector<1x128xf32>
    %cst_56 = arith.constant 0.000000e+00 : f32
    %98 = vector.broadcast %cst_56 : f32 to vector<1x128xf32>
    %99 = arith.maximumf %97, %98 : vector<1x128xf32>
    %100 = vector.broadcast %90 : vector<1x128xf32> to vector<32x128xf32>
    %101 = arith.subf %82, %100 : vector<32x128xf32>
    %cst_57 = arith.constant 9.99999974E-6 : f32
    %102 = vector.broadcast %cst_57 : f32 to vector<1x128xf32>
    %103 = arith.addf %99, %102 : vector<1x128xf32>
    %104 = math.rsqrt %103 : vector<1x128xf32>
    %105 = vector.broadcast %104 : vector<1x128xf32> to vector<32x128xf32>
    %106 = arith.mulf %101, %105 : vector<32x128xf32>
    %107 = vector.broadcast %84 : vector<1x128xf32> to vector<32x128xf32>
    %108 = arith.mulf %106, %107 : vector<32x128xf32>
    %109 = vector.broadcast %86 : vector<1x128xf32> to vector<32x128xf32>
    %110 = arith.addf %108, %109 : vector<32x128xf32>
    %111 = vector.shape_cast %110 : vector<32x128xf32> to vector<2x16x128xf32>
    %c1_i32 = arith.constant 1 : i32
    %112 = arith.cmpi ne, %arg0, %c1_i32 : i32
    %113 = arith.extui %112 : i1 to i32
    %c0_i32_58 = arith.constant 0 : i32
    %114 = arith.cmpi ne, %113, %c0_i32_58 : i32
    scf.if %114 {
      %c0_61 = arith.constant 0 : index
      %c1_62 = arith.constant 1 : index
      %c0_63 = arith.constant 0 : index
      %118 = vector.load %arg11[%c0_61, %c1_62, %c0_63] : memref<2x18x128xf32, #tpu.memory_space<vmem>>, vector<2x16x128xf32>
      tpu.vector_store %arg11[%c0_61, %c1_62, %c0_63], %111 {strides = array<i32>} : memref<2x18x128xf32, #tpu.memory_space<vmem>>, vector<2x16x128xf32>,
    } else {
    }
    %c1_i32_59 = arith.constant 1 : i32
    %115 = arith.cmpi eq, %arg0, %c1_i32_59 : i32
    %116 = arith.extui %115 : i1 to i32
    %c0_i32_60 = arith.constant 0 : i32
    %117 = arith.cmpi ne, %116, %c0_i32_60 : i32
    scf.if %117 {
      %c0_61 = arith.constant 0 : index
      %c0_62 = arith.constant 0 : index
      %c0_63 = arith.constant 0 : index
      %118 = vector.load %arg10[%c0_61, %c0_62, %c0_63] : memref<2x16x128xf32, #tpu.memory_space<vmem>>, vector<2x16x128xf32>
      tpu.vector_store %arg10[%c0_61, %c0_62, %c0_63], %111 {strides = array<i32>} : memref<2x16x128xf32, #tpu.memory_space<vmem>>, vector<2x16x128xf32>,
    } else {
    }
    return
  }
  func.func @transform_0(%arg0: i32) -> (i32, i32, i32) {
    %c0_i32 = arith.constant 0 : i32
    %c0_i32_0 = arith.constant 0 : i32
    %c0_i32_1 = arith.constant 0 : i32
    %c0_i32_2 = arith.constant 0 : i32
    return %c0_i32, %c0_i32_0, %c0_i32_1 : i32, i32, i32
  }
  func.func @transform_1(%arg0: i32) -> (i32, i32, i32) {
    %c0_i32 = arith.constant 0 : i32
    %c0_i32_0 = arith.constant 0 : i32
    %c0_i32_1 = arith.constant 0 : i32
    return %arg0, %c0_i32, %c0_i32_0 : i32, i32, i32
  }
  func.func @transform_2(%arg0: i32) -> (i32, i32, i32) {
    %c0_i32 = arith.constant 0 : i32
    %c0_i32_0 = arith.constant 0 : i32
    %c0_i32_1 = arith.constant 0 : i32
    return %arg0, %c0_i32, %c0_i32_0 : i32, i32, i32
  }
  func.func @transform_3(%arg0: i32) -> (i32, i32, i32) {
    %c0_i32 = arith.constant 0 : i32
    %c0_i32_0 = arith.constant 0 : i32
    %c0_i32_1 = arith.constant 0 : i32
    return %arg0, %c0_i32, %c0_i32_0 : i32, i32, i32
  }
  func.func @transform_4(%arg0: i32) -> (i32, i32, i32) {
    %c0_i32 = arith.constant 0 : i32
    %c0_i32_0 = arith.constant 0 : i32
    %c0_i32_1 = arith.constant 0 : i32
    return %arg0, %c0_i32, %c0_i32_0 : i32, i32, i32
  }
  func.func @transform_5(%arg0: i32) -> (i32, i32, i32) {
    %c0_i32 = arith.constant 0 : i32
    %c0_i32_0 = arith.constant 0 : i32
    %c0_i32_1 = arith.constant 0 : i32
    return %arg0, %c0_i32, %c0_i32_0 : i32, i32, i32
  }
  func.func @transform_6(%arg0: i32) -> (i32, i32, i32) {
    %c0_i32 = arith.constant 0 : i32
    %c0_i32_0 = arith.constant 0 : i32
    %c0_i32_1 = arith.constant 0 : i32
    return %arg0, %c0_i32, %c0_i32_0 : i32, i32, i32
  }
  func.func @transform_7(%arg0: i32) -> (i32, i32, i32) {
    %c0_i32 = arith.constant 0 : i32
    %c0_i32_0 = arith.constant 0 : i32
    %c0_i32_1 = arith.constant 0 : i32
    return %arg0, %c0_i32, %c0_i32_0 : i32, i32, i32
  }
  func.func @transform_8(%arg0: i32) -> (i32, i32, i32) {
    %c0_i32 = arith.constant 0 : i32
    %c0_i32_0 = arith.constant 0 : i32
    %c0_i32_1 = arith.constant 0 : i32
    return %arg0, %c0_i32, %c0_i32_0 : i32, i32, i32
  }
  func.func @transform_9(%arg0: i32) -> (i32, i32, i32) {
    %c0_i32 = arith.constant 0 : i32
    %c0_i32_0 = arith.constant 0 : i32
    %c0_i32_1 = arith.constant 0 : i32
    %c0_i32_2 = arith.constant 0 : i32
    return %c0_i32, %c0_i32_0, %c0_i32_1 : i32, i32, i32
  }
}

module attributes {stable_mosaic.version = 11 : i64} {
  func.func @conv_kernel(%arg0: memref<2x16x128xf32, #tpu.memory_space<vmem>>, %arg1: memref<384x4xbf16, #tpu.memory_space<vmem>>, %arg2: memref<1x4xf32, #tpu.memory_space<vmem>>, %arg3: memref<2x16x4xf32, #tpu.memory_space<vmem>>, %arg4: memref<2x18x128xf32, #tpu.memory_space<vmem>>) attributes {dimension_semantics = [], scalar_prefetch = 0 : i64, scratch_operands = 1 : i64, tpu.core_type = #tpu.core_type<tc>} {
    %cst = arith.constant 0.000000e+00 : f32
    %0 = vector.broadcast %cst : f32 to vector<2x18x128xf32>
    %c0 = arith.constant 0 : index
    %c0_0 = arith.constant 0 : index
    %c0_1 = arith.constant 0 : index
    %1 = vector.load %arg4[%c0, %c0_0, %c0_1] : memref<2x18x128xf32, #tpu.memory_space<vmem>>, vector<2x18x128xf32>
    tpu.vector_store %arg4[%c0, %c0_0, %c0_1], %0 {strides = array<i32>} : memref<2x18x128xf32, #tpu.memory_space<vmem>>, vector<2x18x128xf32>,
    %c0_2 = arith.constant 0 : index
    %c0_3 = arith.constant 0 : index
    %c0_4 = arith.constant 0 : index
    %2 = vector.load %arg0[%c0_2, %c0_3, %c0_4] : memref<2x16x128xf32, #tpu.memory_space<vmem>>, vector<2x16x128xf32>
    %c0_5 = arith.constant 0 : index
    %c1 = arith.constant 1 : index
    %c0_6 = arith.constant 0 : index
    %3 = vector.load %arg4[%c0_5, %c1, %c0_6] : memref<2x18x128xf32, #tpu.memory_space<vmem>>, vector<2x16x128xf32>
    tpu.vector_store %arg4[%c0_5, %c1, %c0_6], %2 {strides = array<i32>} : memref<2x18x128xf32, #tpu.memory_space<vmem>>, vector<2x16x128xf32>,
    %c0_7 = arith.constant 0 : index
    %c0_8 = arith.constant 0 : index
    %c0_9 = arith.constant 0 : index
    %4 = vector.load %arg4[%c0_7, %c0_8, %c0_9] : memref<2x18x128xf32, #tpu.memory_space<vmem>>, vector<2x16x128xf32>
    %c0_10 = arith.constant 0 : index
    %c1_11 = arith.constant 1 : index
    %c0_12 = arith.constant 0 : index
    %5 = vector.load %arg4[%c0_10, %c1_11, %c0_12] : memref<2x18x128xf32, #tpu.memory_space<vmem>>, vector<2x16x128xf32>
    %c0_13 = arith.constant 0 : index
    %c2 = arith.constant 2 : index
    %c0_14 = arith.constant 0 : index
    %6 = vector.load %arg4[%c0_13, %c2, %c0_14] : memref<2x18x128xf32, #tpu.memory_space<vmem>>, vector<2x16x128xf32>
    %7 = tpu.concatenate %4, %5, %6 in 2 : vector<2x16x128xf32>, vector<2x16x128xf32>, vector<2x16x128xf32> -> vector<2x16x384xf32>
    %8 = vector.shape_cast %7 : vector<2x16x384xf32> to vector<32x384xf32>
    %9 = arith.truncf %8 : vector<32x384xf32> to vector<32x384xbf16>
    %c0_15 = arith.constant 0 : index
    %c0_16 = arith.constant 0 : index
    %10 = vector.load %arg1[%c0_15, %c0_16] : memref<384x4xbf16, #tpu.memory_space<vmem>>, vector<384x4xbf16>
    %cst_17 = arith.constant dense<0.000000e+00> : vector<32x4xf32>
    %11 = tpu.matmul %9, %10, %cst_17 {dimension_numbers = #tpu.dot_dimension_numbers<[1], [0], [0], [1], [0, 0, 1, 1], [], []>} : vector<32x384xbf16>, vector<384x4xbf16>, vector<32x4xf32> -> vector<32x4xf32>
    %c0_18 = arith.constant 0 : index
    %c0_19 = arith.constant 0 : index
    %12 = vector.load %arg2[%c0_18, %c0_19] : memref<1x4xf32, #tpu.memory_space<vmem>>, vector<1x4xf32>
    %13 = vector.broadcast %12 : vector<1x4xf32> to vector<32x4xf32>
    %14 = arith.addf %11, %13 : vector<32x4xf32>
    %15 = vector.shape_cast %14 : vector<32x4xf32> to vector<2x16x4xf32>
    %c0_20 = arith.constant 0 : index
    %c0_21 = arith.constant 0 : index
    %c0_22 = arith.constant 0 : index
    %16 = vector.load %arg3[%c0_20, %c0_21, %c0_22] : memref<2x16x4xf32, #tpu.memory_space<vmem>>, vector<2x16x4xf32>
    tpu.vector_store %arg3[%c0_20, %c0_21, %c0_22], %15 {strides = array<i32>} : memref<2x16x4xf32, #tpu.memory_space<vmem>>, vector<2x16x4xf32>,
    return
  }
}

</mosaic_0001>

<llo_original>
// kernel: convmixer_autoencoder_forward.5
$region0: #{convmixer_autoencoder_forward.5}
  #allocation0 [shape = 'u32[]', space=smem, size = 0x4, offset = 0x4, fixed_abs, tag = 'smem constant byte address 0x4 - core index']
  #allocation1 [shape = 'u32[72,128]{1,0:T(1,128)}', space=vmem, size = 0x9000, scoped, tag = 'internal scratch']
  #allocation2 [shape = 'f32[2,18,4]{2,1,0:T(8,128)}', space=vmem, size = 0x6000, scoped, tag = 'scratch operand']
  %s0 = inlined_call_operand.vmem [shape: f32[2,16,4], index: 0, kind: input, shape index: {}]
  %s1 = inlined_call_operand.vmem [shape: bf16[12,128], index: 1, kind: input, shape index: {}]
  %s2 = inlined_call_operand.vmem [shape: f32[1,128], index: 2, kind: input, shape index: {}]
  %s3 = inlined_call_operand.vmem [shape: f32[1,128], index: 3, kind: input, shape index: {}]
  %s4 = inlined_call_operand.vmem [shape: f32[1,128], index: 4, kind: input, shape index: {}]
  %s5 = inlined_call_operand.vmem [shape: f32[2,16,128], index: 5, kind: output, shape index: {}]
  %s6 = sld [smem:[#allocation0]]
  $region30: #{convmixer_autoencoder_forward.5} parent=0
    _
  %s8 = ssub.s32 1, %s6
  %s9 = scalar_select 0, %s8, %s6
  // Predicated region
  $region2: #{convmixer_autoencoder_forward.5} parent=0 // pred_check
    _
  $region3: #{convmixer_autoencoder_forward.5} parent=0 // pred_check_branch
    %11 = sbr.rel (0) target = $region5
  $region4: #{convmixer_autoencoder_forward.5} parent=0 // pred_region
    _
  $region5: #{convmixer_autoencoder_forward.5} parent=0 // pred_fallthru
    _
  // Predicated region
  $region6: #{convmixer_autoencoder_forward.5} parent=0 // pred_check
    _
  $region7: #{convmixer_autoencoder_forward.5} parent=0 // pred_check_branch
    %13 = sbr.rel (0) target = $region9
  $region8: #{convmixer_autoencoder_forward.5} parent=0 // pred_region
    _
  $region9: #{convmixer_autoencoder_forward.5} parent=0 // pred_fallthru
    _
  // Predicated region
  $region10: #{convmixer_autoencoder_forward.5} parent=0 // pred_check
    _
  $region11: #{convmixer_autoencoder_forward.5} parent=0 // pred_check_branch
    %15 = sbr.rel (0) target = $region13
  $region12: #{convmixer_autoencoder_forward.5} parent=0 // pred_region
    _
  $region13: #{convmixer_autoencoder_forward.5} parent=0 // pred_fallthru
    _
  // Predicated region
  $region14: #{convmixer_autoencoder_forward.5} parent=0 // pred_check
    _
  $region15: #{convmixer_autoencoder_forward.5} parent=0 // pred_check_branch
    %17 = sbr.rel (0) target = $region17
  $region16: #{convmixer_autoencoder_forward.5} parent=0 // pred_region
    _
  $region17: #{convmixer_autoencoder_forward.5} parent=0 // pred_fallthru
    _
  // Predicated region
  $region18: #{convmixer_autoencoder_forward.5} parent=0 // pred_check
    _
  $region19: #{convmixer_autoencoder_forward.5} parent=0 // pred_check_branch
    %19 = sbr.rel (0) target = $region21
  $region20: #{convmixer_autoencoder_forward.5} parent=0 // pred_region
    _
  $region21: #{convmixer_autoencoder_forward.5} parent=0 // pred_fallthru
    _
  %vm21 = vcmask 31744
  %22 = vst.msk [vmem:[#allocation2] sm:$0xff] %vm21, 0.0
  %23 = vst.msk [vmem:[#allocation2 + $0x8] sm:$0xff] %vm21, 0.0
  %vm24 = vcmask 25600
  %25 = vst.msk [vmem:[#allocation2 + $0x10] sm:$0x3] %vm24, 0.0
  %26 = vst.msk [vmem:[#allocation2 + $0x18] sm:$0xff] %vm21, 0.0
  %27 = vst.msk [vmem:[#allocation2 + $0x20] sm:$0xff] %vm21, 0.0
  %28 = vst.msk [vmem:[#allocation2 + $0x28] sm:$0x3] %vm24, 0.0
  %v29 = vld [vmem:[%s0] sm:$0xff]
  %v30 = vld [vmem:[%s0 + $0x8] sm:$0xff]
  %v31 = vld [vmem:[%s0 + $0x10] sm:$0xff]
  %v32 = vld [vmem:[%s0 + $0x18] sm:$0xff]
  %33 = vst.msk [vmem:[#allocation2 + $0x1] sm:$0xff] %vm21, %v29
  %34 = vst.msk [vmem:[#allocation2 + $0x9] sm:$0xff] %vm21, %v30
  %35 = vst.msk [vmem:[#allocation2 + $0x19] sm:$0xff] %vm21, %v31
  %36 = vst.msk [vmem:[#allocation2 + $0x21] sm:$0xff] %vm21, %v32
  %v37 = vld [vmem:[#allocation2] sm:$0xff]
  %v38 = vld [vmem:[#allocation2 + $0x8] sm:$0xff]
  %v39 = vld [vmem:[#allocation2 + $0x18] sm:$0xff]
  %v40 = vld [vmem:[#allocation2 + $0x20] sm:$0xff]
  %v41 = vpack.c.bf16 %v38, %v37
  %v42 = vpack.c.bf16 %v40, %v39
  %v43 = vld [vmem:[%s1] sm:$0x3]
  %v44 = vld [vmem:[#allocation2 + $0x1] sm:$0xff]
  %v45 = vld [vmem:[#allocation2 + $0x9] sm:$0xff]
  %v46 = vld [vmem:[#allocation2 + $0x19] sm:$0xff]
  %v47 = vld [vmem:[#allocation2 + $0x21] sm:$0xff]
  %v48 = vpack.c.bf16 %v45, %v44
  %v49 = vpack.c.bf16 %v47, %v46
  %v50 = vld [vmem:[%s1] sm:$0xc]
  %v52 = vunpack.c.l.b16 %v50
  %v53 = vpack.c.b16 %v52, %v52
  %v54 = vrot.slane %v53, 2
  %v56 = vsel %vm21, %v48, 0
  %v59 = vsel %vm21, %v49, 0
  %vm61 = vcmask 1041408
  %v63 = vsel %vm61, %v54, 0
  %65 = vmatpush.bf16.msra.mxu0 0
  %66 = vmatpush.bf16.msra.mxu0 0
  %67 = vmatpush.bf16.msra.mxu0 0
  %68 = vmatpush.bf16.msra.mxu0 0
  %69 = vmatpush.bf16.msra.mxu0 0
  %70 = vmatpush.bf16.msra.mxu0 0
  %71 = vmatpush.bf16.msra.mxu0 0
  %72 = vmatpush.bf16.msra.mxu0 %v63
  %73 = vmatmul.bf16.gmra.mxu0 %v56
  %v74 = vpop.f32.mrf.mxu0
  %v75 = vadd.f32 0.0, %v74
  %v76 = vpop.f32.mrf.mxu0
  %v77 = vadd.f32 0.0, %v76
  %78 = vmatmul.bf16.gmra.mxu0 %v59
  %v79 = vpop.f32.mrf.mxu0
  %v80 = vadd.f32 0.0, %v79
  %v81 = vpop.f32.mrf.mxu0
  %v82 = vadd.f32 0.0, %v81
  %83 = vdwg.mxu0
  %v85 = vsel %vm21, %v41, 0
  %v88 = vsel %vm21, %v42, 0
  %v91 = vsel %vm61, %v43, 0
  %93 = vmatpush.bf16.msra.mxu0 0
  %94 = vmatpush.bf16.msra.mxu0 0
  %95 = vmatpush.bf16.msra.mxu0 0
  %96 = vmatpush.bf16.msra.mxu0 0
  %97 = vmatpush.bf16.msra.mxu0 0
  %98 = vmatpush.bf16.msra.mxu0 0
  %99 = vmatpush.bf16.msra.mxu0 0
  %100 = vmatpush.bf16.msra.mxu0 %v91
  %101 = vmatmul.bf16.gmra.mxu0 %v85
  %v102 = vpop.f32.mrf.mxu0
  %v103 = vadd.f32 %v75, %v102
  %v104 = vpop.f32.mrf.mxu0
  %v105 = vadd.f32 %v77, %v104
  %106 = vmatmul.bf16.gmra.mxu0 %v88
  %v107 = vpop.f32.mrf.mxu0
  %v108 = vadd.f32 %v80, %v107
  %v109 = vpop.f32.mrf.mxu0
  %v110 = vadd.f32 %v82, %v109
  %111 = vdwg.mxu0
  %v112 = vld [vmem:[#allocation2 + $0x2] sm:$0xff]
  %v113 = vld [vmem:[#allocation2 + $0xa] sm:$0xff]
  %v114 = vld [vmem:[#allocation2 + $0x1a] sm:$0xff]
  %v115 = vld [vmem:[#allocation2 + $0x22] sm:$0xff]
  %v116 = vpack.c.bf16 %v113, %v112
  %v117 = vpack.c.bf16 %v115, %v114
  %v118 = vld [vmem:[%s1 + $0x4] sm:$0x3]
  %v120 = vsel %vm21, %v116, 0
  %v123 = vsel %vm21, %v117, 0
  %v126 = vsel %vm61, %v118, 0
  %128 = vmatpush.bf16.msra.mxu0 0
  %129 = vmatpush.bf16.msra.mxu0 0
  %130 = vmatpush.bf16.msra.mxu0 0
  %131 = vmatpush.bf16.msra.mxu0 0
  %132 = vmatpush.bf16.msra.mxu0 0
  %133 = vmatpush.bf16.msra.mxu0 0
  %134 = vmatpush.bf16.msra.mxu0 0
  %135 = vmatpush.bf16.msra.mxu0 %v126
  %136 = vmatmul.bf16.gmra.mxu0 %v120
  %v137 = vpop.f32.mrf.mxu0
  %v138 = vadd.f32 0.0, %v137
  %v139 = vpop.f32.mrf.mxu0
  %v140 = vadd.f32 0.0, %v139
  %141 = vmatmul.bf16.gmra.mxu0 %v123
  %v142 = vpop.f32.mrf.mxu0
  %v143 = vadd.f32 0.0, %v142
  %v144 = vpop.f32.mrf.mxu0
  %v145 = vadd.f32 0.0, %v144
  %146 = vdwg.mxu0
  %v147 = vadd.f32 %v103, %v138
  %v148 = vadd.f32 %v105, %v140
  %v149 = vadd.f32 %v108, %v143
  %v150 = vadd.f32 %v110, %v145
  %v151 = vld [vmem:[%s2] sm:$0x1]
  %v153 = vperm.slane %v151, 0
  %v155 = vadd.f32 %v147, %v153
  %v156 = vadd.f32 %v148, %v153
  %v157 = vadd.f32 %v149, %v153
  %v158 = vadd.f32 %v150, %v153
  %v159 = vmul.f32 %v155, 0.5
  %v160 = vmul.f32 %v156, 0.5
  %v161 = vmul.f32 %v157, 0.5
  %v162 = vmul.f32 %v158, 0.5
  %v163 = vmul.f32 %v155, 0.70710677
  %v164 = vmul.f32 %v156, 0.70710677
  %v165 = vmul.f32 %v157, 0.70710677
  %v166 = vmul.f32 %v158, 0.70710677
  %v167 = vmul.f32 %v163, %v163
  %v168 = vmin.f32 16.0, %v167
  %v169 = vmul.f32 %v168, 2.1237322e-06
  %v170 = vadd.f32 %v169, 0.00028619796
  %v171 = vmul.f32 %v168, %v170
  %v172 = vadd.f32 %v171, 0.0036580483
  %v173 = vmul.f32 %v168, %v172
  %v174 = vadd.f32 %v173, 0.05243302
  %v175 = vmul.f32 %v168, %v174
  %v176 = vadd.f32 %v175, 0.18741608
  %v177 = vmul.f32 %v168, %v176
  %v178 = vadd.f32 %v177, 1.1283791
  %v179 = vmul.f32 %v163, %v178
  %v180 = vmul.f32 %v168, 3.8918573e-05
  %v181 = vadd.f32 %v180, 0.001143296
  %v182 = vmul.f32 %v168, %v181
  %v183 = vadd.f32 %v182, 0.014752088
  %v184 = vmul.f32 %v168, %v183
  %v185 = vadd.f32 %v184, 0.112945676
  %v186 = vmul.f32 %v168, %v185
  %v187 = vadd.f32 %v186, 0.4994258
  %v188 = vmul.f32 %v168, %v187
  %v189 = vadd.f32 %v188, 1.0
  %v190 = vrcp.pop %v189
  %v191 = vmul.f32 %v189, %v190
  %v192 = vsub.f32 1.0, %v191
  %v193 = vmul.f32 %v190, %v192
  %v194 = vadd.f32 %v190, %v193
  %vm195 = vweird.f32 %v189
  %vm196 = vweird.f32 %v190
  %vm197 = vmor %vm195, %vm196
  %v198 = vsel %vm197, %v190, %v194
  %v199 = vand.u32 2147483647, %v189
  %vm200 = vcmp.eq.f32.partialorder %v199, 8.507059e+37
  %v201 = vand.u32 %v189, 2147483648
  %v202 = vor.u32 1.1754944e-38, %v201
  %v203 = vsel %vm200, %v202, %v198
  %v204 = vmul.f32 %v179, %v203
  %v205 = vmin.f32 %v204, 1.0
  %v206 = vmax.f32 %v205, -1.0
  %v207 = vmul.f32 %v164, %v164
  %v208 = vmin.f32 16.0, %v207
  %v209 = vmul.f32 %v208, 2.1237322e-06
  %v210 = vadd.f32 %v209, 0.00028619796
  %v211 = vmul.f32 %v208, %v210
  %v212 = vadd.f32 %v211, 0.0036580483
  %v213 = vmul.f32 %v208, %v212
  %v214 = vadd.f32 %v213, 0.05243302
  %v215 = vmul.f32 %v208, %v214
  %v216 = vadd.f32 %v215, 0.18741608
  %v217 = vmul.f32 %v208, %v216
  %v218 = vadd.f32 %v217, 1.1283791
  %v219 = vmul.f32 %v164, %v218
  %v220 = vmul.f32 %v208, 3.8918573e-05
  %v221 = vadd.f32 %v220, 0.001143296
  %v222 = vmul.f32 %v208, %v221
  %v223 = vadd.f32 %v222, 0.014752088
  %v224 = vmul.f32 %v208, %v223
  %v225 = vadd.f32 %v224, 0.112945676
  %v226 = vmul.f32 %v208, %v225
  %v227 = vadd.f32 %v226, 0.4994258
  %v228 = vmul.f32 %v208, %v227
  %v229 = vadd.f32 %v228, 1.0
  %v230 = vrcp.pop %v229
  %v231 = vmul.f32 %v229, %v230
  %v232 = vsub.f32 1.0, %v231
  %v233 = vmul.f32 %v230, %v232
  %v234 = vadd.f32 %v230, %v233
  %vm235 = vweird.f32 %v229
  %vm236 = vweird.f32 %v230
  %vm237 = vmor %vm235, %vm236
  %v238 = vsel %vm237, %v230, %v234
  %v239 = vand.u32 2147483647, %v229
  %vm240 = vcmp.eq.f32.partialorder %v239, 8.507059e+37
  %v241 = vand.u32 %v229, 2147483648
  %v242 = vor.u32 1.1754944e-38, %v241
  %v243 = vsel %vm240, %v242, %v238
  %v244 = vmul.f32 %v219, %v243
  %v245 = vmin.f32 %v244, 1.0
  %v246 = vmax.f32 %v245, -1.0
  %v247 = vmul.f32 %v165, %v165
  %v248 = vmin.f32 16.0, %v247
  %v249 = vmul.f32 %v248, 2.1237322e-06
  %v250 = vadd.f32 %v249, 0.00028619796
  %v251 = vmul.f32 %v248, %v250
  %v252 = vadd.f32 %v251, 0.0036580483
  %v253 = vmul.f32 %v248, %v252
  %v254 = vadd.f32 %v253, 0.05243302
  %v255 = vmul.f32 %v248, %v254
  %v256 = vadd.f32 %v255, 0.18741608
  %v257 = vmul.f32 %v248, %v256
  %v258 = vadd.f32 %v257, 1.1283791
  %v259 = vmul.f32 %v165, %v258
  %v260 = vmul.f32 %v248, 3.8918573e-05
  %v261 = vadd.f32 %v260, 0.001143296
  %v262 = vmul.f32 %v248, %v261
  %v263 = vadd.f32 %v262, 0.014752088
  %v264 = vmul.f32 %v248, %v263
  %v265 = vadd.f32 %v264, 0.112945676
  %v266 = vmul.f32 %v248, %v265
  %v267 = vadd.f32 %v266, 0.4994258
  %v268 = vmul.f32 %v248, %v267
  %v269 = vadd.f32 %v268, 1.0
  %v270 = vrcp.pop %v269
  %v271 = vmul.f32 %v269, %v270
  %v272 = vsub.f32 1.0, %v271
  %v273 = vmul.f32 %v270, %v272
  %v274 = vadd.f32 %v270, %v273
  %vm275 = vweird.f32 %v269
  %vm276 = vweird.f32 %v270
  %vm277 = vmor %vm275, %vm276
  %v278 = vsel %vm277, %v270, %v274
  %v279 = vand.u32 2147483647, %v269
  %vm280 = vcmp.eq.f32.partialorder %v279, 8.507059e+37
  %v281 = vand.u32 %v269, 2147483648
  %v282 = vor.u32 1.1754944e-38, %v281
  %v283 = vsel %vm280, %v282, %v278
  %v284 = vmul.f32 %v259, %v283
  %v285 = vmin.f32 %v284, 1.0
  %v286 = vmax.f32 %v285, -1.0
  %v287 = vmul.f32 %v166, %v166
  %v288 = vmin.f32 16.0, %v287
  %v289 = vmul.f32 %v288, 2.1237322e-06
  %v290 = vadd.f32 %v289, 0.00028619796
  %v291 = vmul.f32 %v288, %v290
  %v292 = vadd.f32 %v291, 0.0036580483
  %v293 = vmul.f32 %v288, %v292
  %v294 = vadd.f32 %v293, 0.05243302
  %v295 = vmul.f32 %v288, %v294
  %v296 = vadd.f32 %v295, 0.18741608
  %v297 = vmul.f32 %v288, %v296
  %v298 = vadd.f32 %v297, 1.1283791
  %v299 = vmul.f32 %v166, %v298
  %v300 = vmul.f32 %v288, 3.8918573e-05
  %v301 = vadd.f32 %v300, 0.001143296
  %v302 = vmul.f32 %v288, %v301
  %v303 = vadd.f32 %v302, 0.014752088
  %v304 = vmul.f32 %v288, %v303
  %v305 = vadd.f32 %v304, 0.112945676
  %v306 = vmul.f32 %v288, %v305
  %v307 = vadd.f32 %v306, 0.4994258
  %v308 = vmul.f32 %v288, %v307
  %v309 = vadd.f32 %v308, 1.0
  %v310 = vrcp.pop %v309
  %v311 = vmul.f32 %v309, %v310
  %v312 = vsub.f32 1.0, %v311
  %v313 = vmul.f32 %v310, %v312
  %v314 = vadd.f32 %v310, %v313
  %vm315 = vweird.f32 %v309
  %vm316 = vweird.f32 %v310
  %vm317 = vmor %vm315, %vm316
  %v318 = vsel %vm317, %v310, %v314
  %v319 = vand.u32 2147483647, %v309
  %vm320 = vcmp.eq.f32.partialorder %v319, 8.507059e+37
  %v321 = vand.u32 %v309, 2147483648
  %v322 = vor.u32 1.1754944e-38, %v321
  %v323 = vsel %vm320, %v322, %v318
  %v324 = vmul.f32 %v299, %v323
  %v325 = vmin.f32 %v324, 1.0
  %v326 = vmax.f32 %v325, -1.0
  %v327 = vadd.f32 %v206, 1.0
  %v328 = vadd.f32 %v246, 1.0
  %v329 = vadd.f32 %v286, 1.0
  %v330 = vadd.f32 %v326, 1.0
  %v331 = vmul.f32 %v159, %v327
  %v332 = vmul.f32 %v160, %v328
  %v333 = vmul.f32 %v161, %v329
  %v334 = vmul.f32 %v162, %v330
  %v335 = vld [vmem:[%s3] sm:$0x1]
  %v336 = vld [vmem:[%s4] sm:$0x1]
  %v337 = vadd.f32 %v331, %v332
  %v338 = vadd.f32 %v337, %v333
  %v339 = vadd.f32 %v338, %v334
  %v340 = vrot.slane %v339, 4
  %v341 = vadd.f32 %v339, %v340
  %v342 = vrot.slane %v341, 2
  %v343 = vadd.f32 %v341, %v342
  %v344 = vrot.slane %v343, 1
  %v345 = vadd.f32 %v343, %v344
  %v346 = vmul.f32 %v345, 0.03125
  %v347 = vmul.f32 %v331, %v331
  %v348 = vmul.f32 %v332, %v332
  %v349 = vmul.f32 %v333, %v333
  %v350 = vmul.f32 %v334, %v334
  %v351 = vadd.f32 %v347, %v348
  %v352 = vadd.f32 %v351, %v349
  %v353 = vadd.f32 %v352, %v350
  %v354 = vrot.slane %v353, 4
  %v355 = vadd.f32 %v353, %v354
  %v356 = vrot.slane %v355, 2
  %v357 = vadd.f32 %v355, %v356
  %v358 = vrot.slane %v357, 1
  %v359 = vadd.f32 %v357, %v358
  %v360 = vmul.f32 %v359, 0.03125
  %v361 = vmul.f32 %v346, %v346
  %v362 = vsub.f32 %v360, %v361
  %v363 = vmax.f32 %v362, 0.0
  %v364 = vsub.f32 %v331, %v346
  %v365 = vsub.f32 %v332, %v346
  %v366 = vsub.f32 %v333, %v346
  %v367 = vsub.f32 %v334, %v346
  %v368 = vadd.f32 %v363, 1e-05
  %v369 = vrsqrt.pop %v368
  %v370 = vmul.f32 %v369, %v368
  %v371 = vmul.f32 %v370, %v369
  %v372 = vmul.f32 0.5, %v371
  %v373 = vsub.f32 1.5, %v372
  %v374 = vmul.f32 %v369, %v373
  %vm375 = vweird.f32 %v368
  %vm376 = vweird.f32 %v369
  %vm377 = vmor %vm375, %vm376
  %v378 = vsel %vm377, %v369, %v374
  %v379 = vmul.f32 %v364, %v378
  %v380 = vmul.f32 %v365, %v378
  %v381 = vmul.f32 %v366, %v378
  %v382 = vmul.f32 %v367, %v378
  %v384 = vperm.slane %v335, 0
  %v386 = vmul.f32 %v379, %v384
  %v387 = vmul.f32 %v380, %v384
  %v388 = vmul.f32 %v381, %v384
  %v389 = vmul.f32 %v382, %v384
  %v391 = vperm.slane %v336, 0
  %v393 = vadd.f32 %v386, %v391
  %v394 = vadd.f32 %v387, %v391
  %v395 = vadd.f32 %v388, %v391
  %v396 = vadd.f32 %v389, %v391
  %397 = vst [vmem:[%s5] sm:$0xff] %v393
  %398 = vst [vmem:[%s5 + $0x8] sm:$0xff] %v394
  %399 = vst [vmem:[%s5 + $0x10] sm:$0xff] %v395
  %400 = vst [vmem:[%s5 + $0x18] sm:$0xff] %v396
  // Predicated region
  $region22: #{convmixer_autoencoder_forward.5} parent=0 // pred_check
    _
  $region23: #{convmixer_autoencoder_forward.5} parent=0 // pred_check_branch
    %402 = sbr.rel (0) target = $region25
  $region24: #{convmixer_autoencoder_forward.5} parent=0 // pred_region
    _
  $region25: #{convmixer_autoencoder_forward.5} parent=0 // pred_fallthru
    _
  // Predicated region
  $region26: #{convmixer_autoencoder_forward.5} parent=0 // pred_check
    _
  $region27: #{convmixer_autoencoder_forward.5} parent=0 // pred_check_branch
    %404 = sbr.rel (0) target = $region29
  $region28: #{convmixer_autoencoder_forward.5} parent=0 // pred_region
    _
  $region29: #{convmixer_autoencoder_forward.5} parent=0 // pred_fallthru
    _

// kernel: convmixer_autoencoder_forward.7
$region0: #{convmixer_autoencoder_forward.7}
  #allocation0 [shape = 'u32[]', space=smem, size = 0x4, offset = 0x4, fixed_abs, tag = 'smem constant byte address 0x4 - core index']
  #allocation1 [shape = 'u32[72,128]{1,0:T(1,128)}', space=vmem, size = 0x9000, scoped, tag = 'internal scratch']
  #allocation2 [shape = 'f32[2,18,128]{2,1,0:T(8,128)}', space=vmem, size = 0x6000, scoped, tag = 'scratch operand']
  %s0 = inlined_call_operand.vmem [shape: f32[2,16,128], index: 0, kind: input, shape index: {}]
  %s1 = inlined_call_operand.hbm [shape: bf16[384,128], index: 1, kind: input, shape index: {}]
  %s2 = inlined_call_operand.vmem [shape: f32[1,128], index: 2, kind: input, shape index: {}]
  %s3 = inlined_call_operand.vmem [shape: f32[2,16,128], index: 3, kind: output, shape index: {}]
  %s4 = sld [smem:[#allocation0]]
  $region26: #{convmixer_autoencoder_forward.7} parent=0
    _
  %s6 = ssub.s32 1, %s4
  %s7 = scalar_select 0, %s6, %s4
  $region1: #{convmixer_autoencoder_forward.7} parent=0
    #allocation3 [shape = 'u8[98304]{0}', space=vmem, size = 0x18000, scoped, tag = 'input window, operand 1, single buffered']
    #allocation4 [shape = 's32[1]{0}', space=sflag, size = 0x4, scoped, tag = 'scoped memory for convmixer_autoencoder_forward.7']
    %8 = vsyncpa [#allocation4], 0
    // Predicated region
    $region2: #{convmixer_autoencoder_forward.7} parent=1 // pred_check
      _
    $region3: #{convmixer_autoencoder_forward.7} parent=1 // pred_check_branch
      %10 = sbr.rel (0) target = $region5
    $region4: #{convmixer_autoencoder_forward.7} parent=1 // pred_region
      _
    $region5: #{convmixer_autoencoder_forward.7} parent=1 // pred_fallthru
      _
    // Predicated region
    $region6: #{convmixer_autoencoder_forward.7} parent=1 // pred_check
      _
    $region7: #{convmixer_autoencoder_forward.7} parent=1 // pred_check_branch
      %12 = sbr.rel (0) target = $region9
    $region8: #{convmixer_autoencoder_forward.7} parent=1 // pred_region
      %14 = vsyncadd [#allocation4], 0
      %s15 = sshll.u32 %s1, 4
      %s16 = int_to_ptr.hbm [resolvable:$true] %s15
      %s17 = sshll.u32 [#allocation3], 4
      %s18 = int_to_ptr.vmem [resolvable:$true] %s17
      %23 = dma.hbm_to_vmem [thread:$0]  %s16, 3072, %s18, [#allocation4], 64, 64, 4
    $region9: #{convmixer_autoencoder_forward.7} parent=1 // pred_fallthru
      _
    // Predicated region
    $region10: #{convmixer_autoencoder_forward.7} parent=1 // pred_check
      _
    $region11: #{convmixer_autoencoder_forward.7} parent=1 // pred_check_branch
      %25 = sbr.rel (0) target = $region13
    $region12: #{convmixer_autoencoder_forward.7} parent=1 // pred_region
      _
    $region13: #{convmixer_autoencoder_forward.7} parent=1 // pred_fallthru
      _
    // Predicated region
    $region14: #{convmixer_autoencoder_forward.7} parent=1 // pred_check
      _
    $region15: #{convmixer_autoencoder_forward.7} parent=1 // pred_check_branch
      %27 = sbr.rel (0) target = $region17
    $region16: #{convmixer_autoencoder_forward.7} parent=1 // pred_region
      %29 = dma.done [#allocation4], 3072
    $region17: #{convmixer_autoencoder_forward.7} parent=1 // pred_fallthru
      _
    %30 = vst [vmem:[#allocation2] sm:$0xff] 0.0
    %31 = vst [vmem:[#allocation2 + $0x8] sm:$0xff] 0.0
    %32 = vst [vmem:[#allocation2 + $0x10] sm:$0x3] 0.0
    %33 = vst [vmem:[#allocation2 + $0x18] sm:$0xff] 0.0
    %34 = vst [vmem:[#allocation2 + $0x20] sm:$0xff] 0.0
    %35 = vst [vmem:[#allocation2 + $0x28] sm:$0x3] 0.0
    %v36 = vld [vmem:[%s0] sm:$0xff]
    %v37 = vld [vmem:[%s0 + $0x8] sm:$0xff]
    %v38 = vld [vmem:[%s0 + $0x10] sm:$0xff]
    %v39 = vld [vmem:[%s0 + $0x18] sm:$0xff]
    %40 = vst [vmem:[#allocation2 + $0x1] sm:$0xff] %v36
    %41 = vst [vmem:[#allocation2 + $0x9] sm:$0xff] %v37
    %42 = vst [vmem:[#allocation2 + $0x19] sm:$0xff] %v38
    %43 = vst [vmem:[#allocation2 + $0x21] sm:$0xff] %v39
    %v44 = vld [vmem:[#allocation2] sm:$0xff]
    %v45 = vld [vmem:[#allocation2 + $0x8] sm:$0xff]
    %v46 = vld [vmem:[#allocation2 + $0x18] sm:$0xff]
    %v47 = vld [vmem:[#allocation2 + $0x20] sm:$0xff]
    %v48 = vld [vmem:[#allocation2 + $0x1] sm:$0xff]
    %v49 = vld [vmem:[#allocation2 + $0x9] sm:$0xff]
    %v50 = vld [vmem:[#allocation2 + $0x19] sm:$0xff]
    %v51 = vld [vmem:[#allocation2 + $0x21] sm:$0xff]
    %v52 = vld [vmem:[#allocation2 + $0x2] sm:$0xff]
    %v53 = vld [vmem:[#allocation2 + $0xa] sm:$0xff]
    %v54 = vld [vmem:[#allocation2 + $0x1a] sm:$0xff]
    %v55 = vld [vmem:[#allocation2 + $0x22] sm:$0xff]
    %v56 = vpack.c.bf16 %v45, %v44
    %v57 = vpack.c.bf16 %v49, %v48
    %v58 = vpack.c.bf16 %v53, %v52
    %v59 = vpack.c.bf16 %v47, %v46
    %v60 = vpack.c.bf16 %v51, %v50
    %v61 = vpack.c.bf16 %v55, %v54
    %v62 = vld [vmem:[#allocation3] sm:$0xf]
    %v63 = vld [vmem:[#allocation3 + $0x4] sm:$0xf]
    %v64 = vld [vmem:[#allocation3 + $0x8] sm:$0xf]
    %v65 = vld [vmem:[#allocation3 + $0xc] sm:$0xf]
    %v66 = vld [vmem:[#allocation3 + $0x10] sm:$0xf]
    %v67 = vld [vmem:[#allocation3 + $0x14] sm:$0xf]
    %v68 = vld [vmem:[#allocation3 + $0x18] sm:$0xf]
    %v69 = vld [vmem:[#allocation3 + $0x1c] sm:$0xf]
    %v70 = vld [vmem:[#allocation3 + $0x20] sm:$0xf]
    %v71 = vld [vmem:[#allocation3 + $0x24] sm:$0xf]
    %v72 = vld [vmem:[#allocation3 + $0x28] sm:$0xf]
    %v73 = vld [vmem:[#allocation3 + $0x2c] sm:$0xf]
    %v74 = vld [vmem:[#allocation3 + $0x30] sm:$0xf]
    %v75 = vld [vmem:[#allocation3 + $0x34] sm:$0xf]
    %v76 = vld [vmem:[#allocation3 + $0x38] sm:$0xf]
    %v77 = vld [vmem:[#allocation3 + $0x3c] sm:$0xf]
    %v78 = vld [vmem:[#allocation3 + $0x40] sm:$0xf]
    %v79 = vld [vmem:[#allocation3 + $0x44] sm:$0xf]
    %v80 = vld [vmem:[#allocation3 + $0x48] sm:$0xf]
    %v81 = vld [vmem:[#allocation3 + $0x4c] sm:$0xf]
    %v82 = vld [vmem:[#allocation3 + $0x50] sm:$0xf]
    %v83 = vld [vmem:[#allocation3 + $0x54] sm:$0xf]
    %v84 = vld [vmem:[#allocation3 + $0x58] sm:$0xf]
    %v85 = vld [vmem:[#allocation3 + $0x5c] sm:$0xf]
    %v86 = vld [vmem:[#allocation3 + $0x60] sm:$0xf]
    %v87 = vld [vmem:[#allocation3 + $0x64] sm:$0xf]
    %v88 = vld [vmem:[#allocation3 + $0x68] sm:$0xf]
    %v89 = vld [vmem:[#allocation3 + $0x6c] sm:$0xf]
    %v90 = vld [vmem:[#allocation3 + $0x70] sm:$0xf]
    %v91 = vld [vmem:[#allocation3 + $0x74] sm:$0xf]
    %v92 = vld [vmem:[#allocation3 + $0x78] sm:$0xf]
    %v93 = vld [vmem:[#allocation3 + $0x7c] sm:$0xf]
    %v94 = vld [vmem:[#allocation3 + $0x80] sm:$0xf]
    %v95 = vld [vmem:[#allocation3 + $0x84] sm:$0xf]
    %v96 = vld [vmem:[#allocation3 + $0x88] sm:$0xf]
    %v97 = vld [vmem:[#allocation3 + $0x8c] sm:$0xf]
    %v98 = vld [vmem:[#allocation3 + $0x90] sm:$0xf]
    %v99 = vld [vmem:[#allocation3 + $0x94] sm:$0xf]
    %v100 = vld [vmem:[#allocation3 + $0x98] sm:$0xf]
    %v101 = vld [vmem:[#allocation3 + $0x9c] sm:$0xf]
    %v102 = vld [vmem:[#allocation3 + $0xa0] sm:$0xf]
    %v103 = vld [vmem:[#allocation3 + $0xa4] sm:$0xf]
    %v104 = vld [vmem:[#allocation3 + $0xa8] sm:$0xf]
    %v105 = vld [vmem:[#allocation3 + $0xac] sm:$0xf]
    %v106 = vld [vmem:[#allocation3 + $0xb0] sm:$0xf]
    %v107 = vld [vmem:[#allocation3 + $0xb4] sm:$0xf]
    %v108 = vld [vmem:[#allocation3 + $0xb8] sm:$0xf]
    %v109 = vld [vmem:[#allocation3 + $0xbc] sm:$0xf]
    %v110 = vld [vmem:[%s2] sm:$0x1]
    %v112 = vperm.slane %v110, 0
    %v162 = vunpack.c.l.b16 %v62
    %v163 = vunpack.c.l.b16 %v63
    %v164 = vunpack.c.l.b16 %v64
    %v165 = vunpack.c.l.b16 %v65
    %v166 = vunpack.c.l.b16 %v66
    %v167 = vunpack.c.l.b16 %v67
    %v168 = vunpack.c.l.b16 %v68
    %v169 = vunpack.c.l.b16 %v69
    %v170 = vunpack.c.l.b16 %v70
    %v171 = vunpack.c.l.b16 %v71
    %v172 = vunpack.c.l.b16 %v72
    %v173 = vunpack.c.l.b16 %v73
    %v174 = vunpack.c.l.b16 %v74
    %v175 = vunpack.c.l.b16 %v75
    %v176 = vunpack.c.l.b16 %v76
    %v177 = vunpack.c.l.b16 %v77
    %v178 = vunpack.c.l.b16 %v78
    %v179 = vunpack.c.l.b16 %v79
    %v180 = vunpack.c.l.b16 %v80
    %v181 = vunpack.c.l.b16 %v81
    %v182 = vunpack.c.l.b16 %v82
    %v183 = vunpack.c.l.b16 %v83
    %v184 = vunpack.c.l.b16 %v84
    %v185 = vunpack.c.l.b16 %v85
    %v186 = vunpack.c.l.b16 %v86
    %v187 = vunpack.c.l.b16 %v87
    %v188 = vunpack.c.l.b16 %v88
    %v189 = vunpack.c.l.b16 %v89
    %v190 = vunpack.c.l.b16 %v90
    %v191 = vunpack.c.l.b16 %v91
    %v192 = vunpack.c.l.b16 %v92
    %v193 = vunpack.c.l.b16 %v93
    %v194 = vunpack.c.l.b16 %v94
    %v195 = vunpack.c.l.b16 %v95
    %v196 = vunpack.c.l.b16 %v96
    %v197 = vunpack.c.l.b16 %v97
    %v198 = vunpack.c.l.b16 %v98
    %v199 = vunpack.c.l.b16 %v99
    %v200 = vunpack.c.l.b16 %v100
    %v201 = vunpack.c.l.b16 %v101
    %v202 = vunpack.c.l.b16 %v102
    %v203 = vunpack.c.l.b16 %v103
    %v204 = vunpack.c.l.b16 %v104
    %v205 = vunpack.c.l.b16 %v105
    %v206 = vunpack.c.l.b16 %v106
    %v207 = vunpack.c.l.b16 %v107
    %v208 = vunpack.c.l.b16 %v108
    %v209 = vunpack.c.l.b16 %v109
    %v210 = vpack.c.b16 %v163, %v162
    %v211 = vpack.c.b16 %v165, %v164
    %v212 = vpack.c.b16 %v167, %v166
    %v213 = vpack.c.b16 %v169, %v168
    %v214 = vpack.c.b16 %v171, %v170
    %v215 = vpack.c.b16 %v173, %v172
    %v216 = vpack.c.b16 %v175, %v174
    %v217 = vpack.c.b16 %v177, %v176
    %v218 = vpack.c.b16 %v179, %v178
    %v219 = vpack.c.b16 %v181, %v180
    %v220 = vpack.c.b16 %v183, %v182
    %v221 = vpack.c.b16 %v185, %v184
    %v222 = vpack.c.b16 %v187, %v186
    %v223 = vpack.c.b16 %v189, %v188
    %v224 = vpack.c.b16 %v191, %v190
    %v225 = vpack.c.b16 %v193, %v192
    %v226 = vpack.c.b16 %v195, %v194
    %v227 = vpack.c.b16 %v197, %v196
    %v228 = vpack.c.b16 %v199, %v198
    %v229 = vpack.c.b16 %v201, %v200
    %v230 = vpack.c.b16 %v203, %v202
    %v231 = vpack.c.b16 %v205, %v204
    %v232 = vpack.c.b16 %v207, %v206
    %v233 = vpack.c.b16 %v209, %v208
    %258 = vmatpush.bf16.msra.mxu0 %v217
    %259 = vmatpush.bf16.msra.mxu0 %v216
    %260 = vmatpush.bf16.msra.mxu0 %v215
    %261 = vmatpush.bf16.msra.mxu0 %v214
    %262 = vmatpush.bf16.msra.mxu0 %v213
    %263 = vmatpush.bf16.msra.mxu0 %v212
    %264 = vmatpush.bf16.msra.mxu0 %v211
    %265 = vmatpush.bf16.msra.mxu0 %v210
    %266 = vmatmul.bf16.gmra.mxu0 %v56
    %v267 = vpop.f32.mrf.mxu0
    %v268 = vadd.f32 %v112, %v267
    %v269 = vpop.f32.mrf.mxu0
    %v270 = vadd.f32 %v112, %v269
    %271 = vmatmul.bf16.gmra.mxu0 %v59
    %v272 = vpop.f32.mrf.mxu0
    %v273 = vadd.f32 %v112, %v272
    %v274 = vpop.f32.mrf.mxu0
    %v275 = vadd.f32 %v112, %v274
    %276 = vdwg.mxu0
    %277 = vmatpush.bf16.msra.mxu0 %v225
    %278 = vmatpush.bf16.msra.mxu0 %v224
    %279 = vmatpush.bf16.msra.mxu0 %v223
    %280 = vmatpush.bf16.msra.mxu0 %v222
    %281 = vmatpush.bf16.msra.mxu0 %v221
    %282 = vmatpush.bf16.msra.mxu0 %v220
    %283 = vmatpush.bf16.msra.mxu0 %v219
    %284 = vmatpush.bf16.msra.mxu0 %v218
    %285 = vmatmul.bf16.gmra.mxu0 %v57
    %v286 = vpop.f32.mrf.mxu0
    %v287 = vadd.f32 %v268, %v286
    %v288 = vpop.f32.mrf.mxu0
    %v289 = vadd.f32 %v270, %v288
    %290 = vmatmul.bf16.gmra.mxu0 %v60
    %v291 = vpop.f32.mrf.mxu0
    %v292 = vadd.f32 %v273, %v291
    %v293 = vpop.f32.mrf.mxu0
    %v294 = vadd.f32 %v275, %v293
    %295 = vdwg.mxu0
    %296 = vmatpush.bf16.msra.mxu0 %v233
    %297 = vmatpush.bf16.msra.mxu0 %v232
    %298 = vmatpush.bf16.msra.mxu0 %v231
    %299 = vmatpush.bf16.msra.mxu0 %v230
    %300 = vmatpush.bf16.msra.mxu0 %v229
    %301 = vmatpush.bf16.msra.mxu0 %v228
    %302 = vmatpush.bf16.msra.mxu0 %v227
    %303 = vmatpush.bf16.msra.mxu0 %v226
    %304 = vmatmul.bf16.gmra.mxu0 %v58
    %v305 = vpop.f32.mrf.mxu0
    %v306 = vadd.f32 %v287, %v305
    %v307 = vpop.f32.mrf.mxu0
    %v308 = vadd.f32 %v289, %v307
    %309 = vmatmul.bf16.gmra.mxu0 %v61
    %v310 = vpop.f32.mrf.mxu0
    %v311 = vadd.f32 %v292, %v310
    %v312 = vpop.f32.mrf.mxu0
    %v313 = vadd.f32 %v294, %v312
    %314 = vdwg.mxu0
    %315 = vst [vmem:[%s3] sm:$0xff] %v306
    %316 = vst [vmem:[%s3 + $0x8] sm:$0xff] %v308
    %317 = vst [vmem:[%s3 + $0x10] sm:$0xff] %v311
    %318 = vst [vmem:[%s3 + $0x18] sm:$0xff] %v313
    // Predicated region
    $region18: #{convmixer_autoencoder_forward.7} parent=1 // pred_check
      _
    $region19: #{convmixer_autoencoder_forward.7} parent=1 // pred_check_branch
      %320 = sbr.rel (0) target = $region21
    $region20: #{convmixer_autoencoder_forward.7} parent=1 // pred_region
      _
    $region21: #{convmixer_autoencoder_forward.7} parent=1 // pred_fallthru
      _
    // Predicated region
    $region22: #{convmixer_autoencoder_forward.7} parent=1 // pred_check
      _
    $region23: #{convmixer_autoencoder_forward.7} parent=1 // pred_check_branch
      %322 = sbr.rel (0) target = $region25
    $region24: #{convmixer_autoencoder_forward.7} parent=1 // pred_region
      _
    $region25: #{convmixer_autoencoder_forward.7} parent=1 // pred_fallthru
      _
    %323 = vsyncpa [#allocation4], 1

// kernel: convmixer_autoencoder_forward.9
$region0: #{convmixer_autoencoder_forward.9}
  #allocation0 [shape = 'u32[]', space=smem, size = 0x4, offset = 0x4, fixed_abs, tag = 'smem constant byte address 0x4 - core index']
  #allocation1 [shape = 'u32[72,128]{1,0:T(1,128)}', space=vmem, size = 0x9000, scoped, tag = 'internal scratch']
  #allocation2 [shape = 'f32[2,18,128]{2,1,0:T(8,128)}', space=vmem, size = 0x6000, scoped, tag = 'scratch operand']
  %s0 = inlined_call_operand.vmem [shape: f32[2,16,128], index: 0, kind: input, shape index: {}]
  %s1 = inlined_call_operand.vmem [shape: bf16[384,4], index: 1, kind: input, shape index: {}]
  %s2 = inlined_call_operand.vmem [shape: f32[1,4], index: 2, kind: input, shape index: {}]
  %s3 = inlined_call_operand.vmem [shape: f32[2,16,4], index: 3, kind: output, shape index: {}]
  %s4 = sld [smem:[#allocation0]]
  $region22: #{convmixer_autoencoder_forward.9} parent=0
    _
  %s6 = ssub.s32 1, %s4
  %s7 = scalar_select 0, %s6, %s4
  // Predicated region
  $region2: #{convmixer_autoencoder_forward.9} parent=0 // pred_check
    _
  $region3: #{convmixer_autoencoder_forward.9} parent=0 // pred_check_branch
    %9 = sbr.rel (0) target = $region5
  $region4: #{convmixer_autoencoder_forward.9} parent=0 // pred_region
    _
  $region5: #{convmixer_autoencoder_forward.9} parent=0 // pred_fallthru
    _
  // Predicated region
  $region6: #{convmixer_autoencoder_forward.9} parent=0 // pred_check
    _
  $region7: #{convmixer_autoencoder_forward.9} parent=0 // pred_check_branch
    %11 = sbr.rel (0) target = $region9
  $region8: #{convmixer_autoencoder_forward.9} parent=0 // pred_region
    _
  $region9: #{convmixer_autoencoder_forward.9} parent=0 // pred_fallthru
    _
  // Predicated region
  $region10: #{convmixer_autoencoder_forward.9} parent=0 // pred_check
    _
  $region11: #{convmixer_autoencoder_forward.9} parent=0 // pred_check_branch
    %13 = sbr.rel (0) target = $region13
  $region12: #{convmixer_autoencoder_forward.9} parent=0 // pred_region
    _
  $region13: #{convmixer_autoencoder_forward.9} parent=0 // pred_fallthru
    _
  %14 = vst [vmem:[#allocation2] sm:$0xff] 0.0
  %15 = vst [vmem:[#allocation2 + $0x8] sm:$0xff] 0.0
  %16 = vst [vmem:[#allocation2 + $0x10] sm:$0x3] 0.0
  %17 = vst [vmem:[#allocation2 + $0x18] sm:$0xff] 0.0
  %18 = vst [vmem:[#allocation2 + $0x20] sm:$0xff] 0.0
  %19 = vst [vmem:[#allocation2 + $0x28] sm:$0x3] 0.0
  %v20 = vld [vmem:[%s0] sm:$0xff]
  %v21 = vld [vmem:[%s0 + $0x8] sm:$0xff]
  %v22 = vld [vmem:[%s0 + $0x10] sm:$0xff]
  %v23 = vld [vmem:[%s0 + $0x18] sm:$0xff]
  %24 = vst [vmem:[#allocation2 + $0x1] sm:$0xff] %v20
  %25 = vst [vmem:[#allocation2 + $0x9] sm:$0xff] %v21
  %26 = vst [vmem:[#allocation2 + $0x19] sm:$0xff] %v22
  %27 = vst [vmem:[#allocation2 + $0x21] sm:$0xff] %v23
  %v28 = vld [vmem:[#allocation2] sm:$0xff]
  %v29 = vld [vmem:[#allocation2 + $0x8] sm:$0xff]
  %v30 = vld [vmem:[#allocation2 + $0x18] sm:$0xff]
  %v31 = vld [vmem:[#allocation2 + $0x20] sm:$0xff]
  %v32 = vld [vmem:[#allocation2 + $0x1] sm:$0xff]
  %v33 = vld [vmem:[#allocation2 + $0x9] sm:$0xff]
  %v34 = vld [vmem:[#allocation2 + $0x19] sm:$0xff]
  %v35 = vld [vmem:[#allocation2 + $0x21] sm:$0xff]
  %v36 = vld [vmem:[#allocation2 + $0x2] sm:$0xff]
  %v37 = vld [vmem:[#allocation2 + $0xa] sm:$0xff]
  %v38 = vld [vmem:[#allocation2 + $0x1a] sm:$0xff]
  %v39 = vld [vmem:[#allocation2 + $0x22] sm:$0xff]
  %v40 = vpack.c.bf16 %v29, %v28
  %v41 = vpack.c.bf16 %v33, %v32
  %v42 = vpack.c.bf16 %v37, %v36
  %v43 = vpack.c.bf16 %v31, %v30
  %v44 = vpack.c.bf16 %v35, %v34
  %v45 = vpack.c.bf16 %v39, %v38
  %v46 = vld [vmem:[%s1] sm:$0xf]
  %v47 = vld [vmem:[%s1 + $0x4] sm:$0xf]
  %v48 = vld [vmem:[%s1 + $0x8] sm:$0xf]
  %v49 = vld [vmem:[%s1 + $0xc] sm:$0xf]
  %v50 = vld [vmem:[%s1 + $0x10] sm:$0xf]
  %v51 = vld [vmem:[%s1 + $0x14] sm:$0xf]
  %v52 = vld [vmem:[%s1 + $0x18] sm:$0xf]
  %v53 = vld [vmem:[%s1 + $0x1c] sm:$0xf]
  %v54 = vld [vmem:[%s1 + $0x20] sm:$0xf]
  %v55 = vld [vmem:[%s1 + $0x24] sm:$0xf]
  %v56 = vld [vmem:[%s1 + $0x28] sm:$0xf]
  %v57 = vld [vmem:[%s1 + $0x2c] sm:$0xf]
  %v58 = vld [vmem:[%s1 + $0x30] sm:$0xf]
  %v59 = vld [vmem:[%s1 + $0x34] sm:$0xf]
  %v60 = vld [vmem:[%s1 + $0x38] sm:$0xf]
  %v61 = vld [vmem:[%s1 + $0x3c] sm:$0xf]
  %v62 = vld [vmem:[%s1 + $0x40] sm:$0xf]
  %v63 = vld [vmem:[%s1 + $0x44] sm:$0xf]
  %v64 = vld [vmem:[%s1 + $0x48] sm:$0xf]
  %v65 = vld [vmem:[%s1 + $0x4c] sm:$0xf]
  %v66 = vld [vmem:[%s1 + $0x50] sm:$0xf]
  %v67 = vld [vmem:[%s1 + $0x54] sm:$0xf]
  %v68 = vld [vmem:[%s1 + $0x58] sm:$0xf]
  %v69 = vld [vmem:[%s1 + $0x5c] sm:$0xf]
  %v70 = vld [vmem:[%s1 + $0x60] sm:$0xf]
  %v71 = vld [vmem:[%s1 + $0x64] sm:$0xf]
  %v72 = vld [vmem:[%s1 + $0x68] sm:$0xf]
  %v73 = vld [vmem:[%s1 + $0x6c] sm:$0xf]
  %v74 = vld [vmem:[%s1 + $0x70] sm:$0xf]
  %v75 = vld [vmem:[%s1 + $0x74] sm:$0xf]
  %v76 = vld [vmem:[%s1 + $0x78] sm:$0xf]
  %v77 = vld [vmem:[%s1 + $0x7c] sm:$0xf]
  %v78 = vld [vmem:[%s1 + $0x80] sm:$0xf]
  %v79 = vld [vmem:[%s1 + $0x84] sm:$0xf]
  %v80 = vld [vmem:[%s1 + $0x88] sm:$0xf]
  %v81 = vld [vmem:[%s1 + $0x8c] sm:$0xf]
  %v82 = vld [vmem:[%s1 + $0x90] sm:$0xf]
  %v83 = vld [vmem:[%s1 + $0x94] sm:$0xf]
  %v84 = vld [vmem:[%s1 + $0x98] sm:$0xf]
  %v85 = vld [vmem:[%s1 + $0x9c] sm:$0xf]
  %v86 = vld [vmem:[%s1 + $0xa0] sm:$0xf]
  %v87 = vld [vmem:[%s1 + $0xa4] sm:$0xf]
  %v88 = vld [vmem:[%s1 + $0xa8] sm:$0xf]
  %v89 = vld [vmem:[%s1 + $0xac] sm:$0xf]
  %v90 = vld [vmem:[%s1 + $0xb0] sm:$0xf]
  %v91 = vld [vmem:[%s1 + $0xb4] sm:$0xf]
  %v92 = vld [vmem:[%s1 + $0xb8] sm:$0xf]
  %v93 = vld [vmem:[%s1 + $0xbc] sm:$0xf]
  %v94 = vld [vmem:[%s2] sm:$0x1]
  %v96 = vperm.slane %v94, 0
  %v146 = vunpack.c.l.b16 %v46
  %v147 = vunpack.c.l.b16 %v47
  %v148 = vunpack.c.l.b16 %v48
  %v149 = vunpack.c.l.b16 %v49
  %v150 = vunpack.c.l.b16 %v50
  %v151 = vunpack.c.l.b16 %v51
  %v152 = vunpack.c.l.b16 %v52
  %v153 = vunpack.c.l.b16 %v53
  %v154 = vunpack.c.l.b16 %v54
  %v155 = vunpack.c.l.b16 %v55
  %v156 = vunpack.c.l.b16 %v56
  %v157 = vunpack.c.l.b16 %v57
  %v158 = vunpack.c.l.b16 %v58
  %v159 = vunpack.c.l.b16 %v59
  %v160 = vunpack.c.l.b16 %v60
  %v161 = vunpack.c.l.b16 %v61
  %v162 = vunpack.c.l.b16 %v62
  %v163 = vunpack.c.l.b16 %v63
  %v164 = vunpack.c.l.b16 %v64
  %v165 = vunpack.c.l.b16 %v65
  %v166 = vunpack.c.l.b16 %v66
  %v167 = vunpack.c.l.b16 %v67
  %v168 = vunpack.c.l.b16 %v68
  %v169 = vunpack.c.l.b16 %v69
  %v170 = vunpack.c.l.b16 %v70
  %v171 = vunpack.c.l.b16 %v71
  %v172 = vunpack.c.l.b16 %v72
  %v173 = vunpack.c.l.b16 %v73
  %v174 = vunpack.c.l.b16 %v74
  %v175 = vunpack.c.l.b16 %v75
  %v176 = vunpack.c.l.b16 %v76
  %v177 = vunpack.c.l.b16 %v77
  %v178 = vunpack.c.l.b16 %v78
  %v179 = vunpack.c.l.b16 %v79
  %v180 = vunpack.c.l.b16 %v80
  %v181 = vunpack.c.l.b16 %v81
  %v182 = vunpack.c.l.b16 %v82
  %v183 = vunpack.c.l.b16 %v83
  %v184 = vunpack.c.l.b16 %v84
  %v185 = vunpack.c.l.b16 %v85
  %v186 = vunpack.c.l.b16 %v86
  %v187 = vunpack.c.l.b16 %v87
  %v188 = vunpack.c.l.b16 %v88
  %v189 = vunpack.c.l.b16 %v89
  %v190 = vunpack.c.l.b16 %v90
  %v191 = vunpack.c.l.b16 %v91
  %v192 = vunpack.c.l.b16 %v92
  %v193 = vunpack.c.l.b16 %v93
  %v194 = vpack.c.b16 %v147, %v146
  %v195 = vpack.c.b16 %v149, %v148
  %v196 = vpack.c.b16 %v151, %v150
  %v197 = vpack.c.b16 %v153, %v152
  %v198 = vpack.c.b16 %v155, %v154
  %v199 = vpack.c.b16 %v157, %v156
  %v200 = vpack.c.b16 %v159, %v158
  %v201 = vpack.c.b16 %v161, %v160
  %v202 = vpack.c.b16 %v163, %v162
  %v203 = vpack.c.b16 %v165, %v164
  %v204 = vpack.c.b16 %v167, %v166
  %v205 = vpack.c.b16 %v169, %v168
  %v206 = vpack.c.b16 %v171, %v170
  %v207 = vpack.c.b16 %v173, %v172
  %v208 = vpack.c.b16 %v175, %v174
  %v209 = vpack.c.b16 %v177, %v176
  %v210 = vpack.c.b16 %v179, %v178
  %v211 = vpack.c.b16 %v181, %v180
  %v212 = vpack.c.b16 %v183, %v182
  %v213 = vpack.c.b16 %v185, %v184
  %v214 = vpack.c.b16 %v187, %v186
  %v215 = vpack.c.b16 %v189, %v188
  %v216 = vpack.c.b16 %v191, %v190
  %v217 = vpack.c.b16 %v193, %v192
  %242 = vmatpush.bf16.msra.mxu0 %v201
  %243 = vmatpush.bf16.msra.mxu0 %v200
  %244 = vmatpush.bf16.msra.mxu0 %v199
  %245 = vmatpush.bf16.msra.mxu0 %v198
  %246 = vmatpush.bf16.msra.mxu0 %v197
  %247 = vmatpush.bf16.msra.mxu0 %v196
  %248 = vmatpush.bf16.msra.mxu0 %v195
  %249 = vmatpush.bf16.msra.mxu0 %v194
  %250 = vmatmul.bf16.gmra.mxu0 %v40
  %v251 = vpop.f32.mrf.mxu0
  %v252 = vadd.f32 %v96, %v251
  %v253 = vpop.f32.mrf.mxu0
  %v254 = vadd.f32 %v96, %v253
  %255 = vmatmul.bf16.gmra.mxu0 %v43
  %v256 = vpop.f32.mrf.mxu0
  %v257 = vadd.f32 %v96, %v256
  %v258 = vpop.f32.mrf.mxu0
  %v259 = vadd.f32 %v96, %v258
  %260 = vdwg.mxu0
  %261 = vmatpush.bf16.msra.mxu0 %v209
  %262 = vmatpush.bf16.msra.mxu0 %v208
  %263 = vmatpush.bf16.msra.mxu0 %v207
  %264 = vmatpush.bf16.msra.mxu0 %v206
  %265 = vmatpush.bf16.msra.mxu0 %v205
  %266 = vmatpush.bf16.msra.mxu0 %v204
  %267 = vmatpush.bf16.msra.mxu0 %v203
  %268 = vmatpush.bf16.msra.mxu0 %v202
  %269 = vmatmul.bf16.gmra.mxu0 %v41
  %v270 = vpop.f32.mrf.mxu0
  %v271 = vadd.f32 %v252, %v270
  %v272 = vpop.f32.mrf.mxu0
  %v273 = vadd.f32 %v254, %v272
  %274 = vmatmul.bf16.gmra.mxu0 %v44
  %v275 = vpop.f32.mrf.mxu0
  %v276 = vadd.f32 %v257, %v275
  %v277 = vpop.f32.mrf.mxu0
  %v278 = vadd.f32 %v259, %v277
  %279 = vdwg.mxu0
  %280 = vmatpush.bf16.msra.mxu0 %v217
  %281 = vmatpush.bf16.msra.mxu0 %v216
  %282 = vmatpush.bf16.msra.mxu0 %v215
  %283 = vmatpush.bf16.msra.mxu0 %v214
  %284 = vmatpush.bf16.msra.mxu0 %v213
  %285 = vmatpush.bf16.msra.mxu0 %v212
  %286 = vmatpush.bf16.msra.mxu0 %v211
  %287 = vmatpush.bf16.msra.mxu0 %v210
  %288 = vmatmul.bf16.gmra.mxu0 %v42
  %v289 = vpop.f32.mrf.mxu0
  %v290 = vadd.f32 %v271, %v289
  %v291 = vpop.f32.mrf.mxu0
  %v292 = vadd.f32 %v273, %v291
  %293 = vmatmul.bf16.gmra.mxu0 %v45
  %v294 = vpop.f32.mrf.mxu0
  %v295 = vadd.f32 %v276, %v294
  %v296 = vpop.f32.mrf.mxu0
  %v297 = vadd.f32 %v278, %v296
  %298 = vdwg.mxu0
  %vm299 = vcmask 31744
  %300 = vst.msk [vmem:[%s3] sm:$0xff] %vm299, %v290
  %301 = vst.msk [vmem:[%s3 + $0x8] sm:$0xff] %vm299, %v292
  %302 = vst.msk [vmem:[%s3 + $0x10] sm:$0xff] %vm299, %v295
  %303 = vst.msk [vmem:[%s3 + $0x18] sm:$0xff] %vm299, %v297
  // Predicated region
  $region14: #{convmixer_autoencoder_forward.9} parent=0 // pred_check
    _
  $region15: #{convmixer_autoencoder_forward.9} parent=0 // pred_check_branch
    %305 = sbr.rel (0) target = $region17
  $region16: #{convmixer_autoencoder_forward.9} parent=0 // pred_region
    _
  $region17: #{convmixer_autoencoder_forward.9} parent=0 // pred_fallthru
    _
  // Predicated region
  $region18: #{convmixer_autoencoder_forward.9} parent=0 // pred_check
    _
  $region19: #{convmixer_autoencoder_forward.9} parent=0 // pred_check_branch
    %307 = sbr.rel (0) target = $region21
  $region20: #{convmixer_autoencoder_forward.9} parent=0 // pred_region
    _
  $region21: #{convmixer_autoencoder_forward.9} parent=0 // pred_fallthru
    _

// kernel: convmixer_autoencoder_forward.6
$region0: #{convmixer_autoencoder_forward.6}
  #allocation0 [shape = 'u32[]', space=smem, size = 0x4, offset = 0x4, fixed_abs, tag = 'smem constant byte address 0x4 - core index']
  #allocation1 [shape = 'u32[72,128]{1,0:T(1,128)}', space=vmem, size = 0x9000, scoped, tag = 'internal scratch']
  #allocation2 [shape = 'f32[2,18,128]{2,1,0:T(8,128)}', space=vmem, size = 0x6000, scoped, tag = 'scratch operand']
  %s0 = inlined_call_operand.vmem [shape: f32[2,16,128], index: 0, kind: input, shape index: {}]
  %s1 = inlined_call_operand.vmem [shape: f32[2,3,128], index: 1, kind: input, shape index: {}]
  %s2 = inlined_call_operand.vmem [shape: f32[2,1,128], index: 2, kind: input, shape index: {}]
  %s3 = inlined_call_operand.vmem [shape: f32[2,1,128], index: 3, kind: input, shape index: {}]
  %s4 = inlined_call_operand.vmem [shape: f32[2,1,128], index: 4, kind: input, shape index: {}]
  %s5 = inlined_call_operand.hbm [shape: bf16[2,128,128], index: 5, kind: input, shape index: {}]
  %s6 = inlined_call_operand.vmem [shape: f32[2,1,128], index: 6, kind: input, shape index: {}]
  %s7 = inlined_call_operand.vmem [shape: f32[2,1,128], index: 7, kind: input, shape index: {}]
  %s8 = inlined_call_operand.vmem [shape: f32[2,1,128], index: 8, kind: input, shape index: {}]
  %s9 = inlined_call_operand.vmem [shape: f32[2,16,128], index: 9, kind: output, shape index: {}]
  %s10 = sld [smem:[#allocation0]]
  $region85: #{convmixer_autoencoder_forward.6} parent=0
    _
  %s12 = ssub.s32 1, %s10
  %s13 = scalar_select 0, %s12, %s10
  $region1: #{convmixer_autoencoder_forward.6} parent=0
    #allocation3 [shape = 'u8[65536]{0}', space=vmem, size = 0x10000, scoped, tag = 'input window, operand 5']
    #allocation4 [shape = 's32[2]{0}', space=sflag, size = 0x8, scoped, tag = 'scoped memory for convmixer_autoencoder_forward.6']
    %14 = vsyncpa [#allocation4], 0
    %s15 = scalar_lea.sflag [#allocation4], 1
    %16 = vsyncpa %s15, 0
    loop: start=0, step=1, limit=4
    $region2: #{convmixer_autoencoder_forward.6} parent=1 // loop_pre_header
      _
    $region3: #{convmixer_autoencoder_forward.6} parent=1 // loop_header
      %s18 = sphi 0, %s22
      %p19 = scmp.ge.s32.totalorder %s18, 4
      %s26 = sphi 0, %s26
      %s28 = sphi 0, %s26
      %s29 = sphi 0, %s28
      %s43 = sphi 0, %s29
      %s49 = sphi 0, %s51
      %s52 = sphi 0, %s49
      %s53 = sphi 0, %s52
      %s69 = sphi 0, %s53
      %s75 = sphi 0, %s77
      %s78 = sphi 0, %s75
      %s79 = sphi 0, %s78
      %s95 = sphi 0, %s79
      %s101 = sphi 0, %s103
      %s104 = sphi 0, %s101
      %s105 = sphi 0, %s104
      %s121 = sphi 0, %s105
      %s127 = sphi 0, %s129
      %s130 = sphi 0, %s127
      %s131 = sphi 0, %s130
      %s147 = sphi 0, %s131
      %s153 = sphi 0, %s155
      %s156 = sphi 0, %s153
      %s157 = sphi 0, %s156
      %s173 = sphi 0, %s157
      %s179 = sphi 0, %s181
      %s182 = sphi 0, %s179
      %s183 = sphi 0, %s182
      %s199 = sphi 0, %s183
      %s205 = sphi 0, %s207
      %s208 = sphi 0, %s205
      %s209 = sphi 0, %s208
      %s225 = sphi 0, %s209
      %s231 = sphi 0, %s233
      %s234 = sphi 0, %s231
      %s235 = sphi 0, %s234
      %s251 = sphi 0, %s235
      %s255 = sphi 0, %s255
      %s257 = sphi 0, %s255
      %s258 = sphi 0, %s257
      %s272 = sphi 0, %s258
    $region4: #{convmixer_autoencoder_forward.6} parent=1 // loop_header_branch
      %21 = sbr.rel (%p19) target = $region8
    $region5: #{convmixer_autoencoder_forward.6} parent=1 // loop_body
      %s23 = ssub.s32 %s18, 1
      %s24 = ssub.s32 %s18, 2
      %s25 = sadd.s32 %s18, 1
      %s27 = sadd.s32 %s26, 1
      %p30 = scmp.eq.s32.totalorder %s18, 1
      %p31 = scmp.ne.s32.totalorder %s26, %s28
      %p32 = scmp.eq.s32.totalorder %s18, 0
      %p33 = por %p31, %p32
      %p34 = scmp.ne.s32.totalorder %s26, %s28
      %p35 = scmp.eq.s32.totalorder %s23, 1
      %p36 = por %p34, %p35
      %p37 = scmp.ne.s32.totalorder %s28, %s29
      %p38 = scmp.eq.s32.totalorder %s23, 0
      %p39 = por %p37, %p38
      %p40 = scmp.ne.s32.totalorder %s28, %s29
      %p41 = scmp.eq.s32.totalorder %s24, 1
      %p42 = por %p40, %p41
      %p44 = scmp.ne.s32.totalorder %s29, %s43
      %p45 = scmp.eq.s32.totalorder %s24, 0
      %p46 = por %p44, %p45
      %s47 = ssub.s32 %s18, %s25
      %p48 = scmp.eq.s32.totalorder %s47, 0
      %s50 = sadd.s32 %s49, 1
      %s51 = scalar_select %p48, %s49, %s50
      %p54 = pneg %p48
      %p55 = scmp.eq.s32.totalorder %s18, 1
      %p56 = por %p54, %p55
      %p57 = scmp.ne.s32.totalorder %s49, %s52
      %p58 = scmp.eq.s32.totalorder %s18, 0
      %p59 = por %p57, %p58
      %p60 = scmp.ne.s32.totalorder %s49, %s52
      %p61 = scmp.eq.s32.totalorder %s23, 1
      %p62 = por %p60, %p61
      %p63 = scmp.ne.s32.totalorder %s52, %s53
      %p64 = scmp.eq.s32.totalorder %s23, 0
      %p65 = por %p63, %p64
      %p66 = scmp.ne.s32.totalorder %s52, %s53
      %p67 = scmp.eq.s32.totalorder %s24, 1
      %p68 = por %p66, %p67
      %p70 = scmp.ne.s32.totalorder %s53, %s69
      %p71 = scmp.eq.s32.totalorder %s24, 0
      %p72 = por %p70, %p71
      %s73 = ssub.s32 %s18, %s25
      %p74 = scmp.eq.s32.totalorder %s73, 0
      %s76 = sadd.s32 %s75, 1
      %s77 = scalar_select %p74, %s75, %s76
      %p80 = pneg %p74
      %p81 = scmp.eq.s32.totalorder %s18, 1
      %p82 = por %p80, %p81
      %p83 = scmp.ne.s32.totalorder %s75, %s78
      %p84 = scmp.eq.s32.totalorder %s18, 0
      %p85 = por %p83, %p84
      %p86 = scmp.ne.s32.totalorder %s75, %s78
      %p87 = scmp.eq.s32.totalorder %s23, 1
      %p88 = por %p86, %p87
      %p89 = scmp.ne.s32.totalorder %s78, %s79
      %p90 = scmp.eq.s32.totalorder %s23, 0
      %p91 = por %p89, %p90
      %p92 = scmp.ne.s32.totalorder %s78, %s79
      %p93 = scmp.eq.s32.totalorder %s24, 1
      %p94 = por %p92, %p93
      %p96 = scmp.ne.s32.totalorder %s79, %s95
      %p97 = scmp.eq.s32.totalorder %s24, 0
      %p98 = por %p96, %p97
      %s99 = ssub.s32 %s18, %s25
      %p100 = scmp.eq.s32.totalorder %s99, 0
      %s102 = sadd.s32 %s101, 1
      %s103 = scalar_select %p100, %s101, %s102
      %p106 = pneg %p100
      %p107 = scmp.eq.s32.totalorder %s18, 1
      %p108 = por %p106, %p107
      %p109 = scmp.ne.s32.totalorder %s101, %s104
      %p110 = scmp.eq.s32.totalorder %s18, 0
      %p111 = por %p109, %p110
      %p112 = scmp.ne.s32.totalorder %s101, %s104
      %p113 = scmp.eq.s32.totalorder %s23, 1
      %p114 = por %p112, %p113
      %p115 = scmp.ne.s32.totalorder %s104, %s105
      %p116 = scmp.eq.s32.totalorder %s23, 0
      %p117 = por %p115, %p116
      %p118 = scmp.ne.s32.totalorder %s104, %s105
      %p119 = scmp.eq.s32.totalorder %s24, 1
      %p120 = por %p118, %p119
      %p122 = scmp.ne.s32.totalorder %s105, %s121
      %p123 = scmp.eq.s32.totalorder %s24, 0
      %p124 = por %p122, %p123
      %s125 = ssub.s32 %s18, %s25
      %p126 = scmp.eq.s32.totalorder %s125, 0
      %s128 = sadd.s32 %s127, 1
      %s129 = scalar_select %p126, %s127, %s128
      %p132 = pneg %p126
      %p133 = scmp.eq.s32.totalorder %s18, 1
      %p134 = por %p132, %p133
      %p135 = scmp.ne.s32.totalorder %s127, %s130
      %p136 = scmp.eq.s32.totalorder %s18, 0
      %p137 = por %p135, %p136
      %p138 = scmp.ne.s32.totalorder %s127, %s130
      %p139 = scmp.eq.s32.totalorder %s23, 1
      %p140 = por %p138, %p139
      %p141 = scmp.ne.s32.totalorder %s130, %s131
      %p142 = scmp.eq.s32.totalorder %s23, 0
      %p143 = por %p141, %p142
      %p144 = scmp.ne.s32.totalorder %s130, %s131
      %p145 = scmp.eq.s32.totalorder %s24, 1
      %p146 = por %p144, %p145
      %p148 = scmp.ne.s32.totalorder %s131, %s147
      %p149 = scmp.eq.s32.totalorder %s24, 0
      %p150 = por %p148, %p149
      %s151 = ssub.s32 %s18, %s25
      %p152 = scmp.eq.s32.totalorder %s151, 0
      %s154 = sadd.s32 %s153, 1
      %s155 = scalar_select %p152, %s153, %s154
      %p158 = pneg %p152
      %p159 = scmp.eq.s32.totalorder %s18, 1
      %p160 = por %p158, %p159
      %p161 = scmp.ne.s32.totalorder %s153, %s156
      %p162 = scmp.eq.s32.totalorder %s18, 0
      %p163 = por %p161, %p162
      %p164 = scmp.ne.s32.totalorder %s153, %s156
      %p165 = scmp.eq.s32.totalorder %s23, 1
      %p166 = por %p164, %p165
      %p167 = scmp.ne.s32.totalorder %s156, %s157
      %p168 = scmp.eq.s32.totalorder %s23, 0
      %p169 = por %p167, %p168
      %p170 = scmp.ne.s32.totalorder %s156, %s157
      %p171 = scmp.eq.s32.totalorder %s24, 1
      %p172 = por %p170, %p171
      %p174 = scmp.ne.s32.totalorder %s157, %s173
      %p175 = scmp.eq.s32.totalorder %s24, 0
      %p176 = por %p174, %p175
      %s177 = ssub.s32 %s18, %s25
      %p178 = scmp.eq.s32.totalorder %s177, 0
      %s180 = sadd.s32 %s179, 1
      %s181 = scalar_select %p178, %s179, %s180
      %p184 = pneg %p178
      %p185 = scmp.eq.s32.totalorder %s18, 1
      %p186 = por %p184, %p185
      %p187 = scmp.ne.s32.totalorder %s179, %s182
      %p188 = scmp.eq.s32.totalorder %s18, 0
      %p189 = por %p187, %p188
      %p190 = scmp.ne.s32.totalorder %s179, %s182
      %p191 = scmp.eq.s32.totalorder %s23, 1
      %p192 = por %p190, %p191
      %p193 = scmp.ne.s32.totalorder %s182, %s183
      %p194 = scmp.eq.s32.totalorder %s23, 0
      %p195 = por %p193, %p194
      %p196 = scmp.ne.s32.totalorder %s182, %s183
      %p197 = scmp.eq.s32.totalorder %s24, 1
      %p198 = por %p196, %p197
      %p200 = scmp.ne.s32.totalorder %s183, %s199
      %p201 = scmp.eq.s32.totalorder %s24, 0
      %p202 = por %p200, %p201
      %s203 = ssub.s32 %s18, %s25
      %p204 = scmp.eq.s32.totalorder %s203, 0
      %s206 = sadd.s32 %s205, 1
      %s207 = scalar_select %p204, %s205, %s206
      %p210 = pneg %p204
      %p211 = scmp.eq.s32.totalorder %s18, 1
      %p212 = por %p210, %p211
      %p213 = scmp.ne.s32.totalorder %s205, %s208
      %p214 = scmp.eq.s32.totalorder %s18, 0
      %p215 = por %p213, %p214
      %p216 = scmp.ne.s32.totalorder %s205, %s208
      %p217 = scmp.eq.s32.totalorder %s23, 1
      %p218 = por %p216, %p217
      %p219 = scmp.ne.s32.totalorder %s208, %s209
      %p220 = scmp.eq.s32.totalorder %s23, 0
      %p221 = por %p219, %p220
      %p222 = scmp.ne.s32.totalorder %s208, %s209
      %p223 = scmp.eq.s32.totalorder %s24, 1
      %p224 = por %p222, %p223
      %p226 = scmp.ne.s32.totalorder %s209, %s225
      %p227 = scmp.eq.s32.totalorder %s24, 0
      %p228 = por %p226, %p227
      %s229 = ssub.s32 %s18, %s25
      %p230 = scmp.eq.s32.totalorder %s229, 0
      %s232 = sadd.s32 %s231, 1
      %s233 = scalar_select %p230, %s231, %s232
      %p236 = pneg %p230
      %p237 = scmp.eq.s32.totalorder %s18, 1
      %p238 = por %p236, %p237
      %p239 = scmp.ne.s32.totalorder %s231, %s234
      %p240 = scmp.eq.s32.totalorder %s18, 0
      %p241 = por %p239, %p240
      %p242 = scmp.ne.s32.totalorder %s231, %s234
      %p243 = scmp.eq.s32.totalorder %s23, 1
      %p244 = por %p242, %p243
      %p245 = scmp.ne.s32.totalorder %s234, %s235
      %p246 = scmp.eq.s32.totalorder %s23, 0
      %p247 = por %p245, %p246
      %p248 = scmp.ne.s32.totalorder %s234, %s235
      %p249 = scmp.eq.s32.totalorder %s24, 1
      %p250 = por %p248, %p249
      %p252 = scmp.ne.s32.totalorder %s235, %s251
      %p253 = scmp.eq.s32.totalorder %s24, 0
      %p254 = por %p252, %p253
      %s256 = sadd.s32 %s255, 1
      %p259 = scmp.eq.s32.totalorder %s18, 1
      %p260 = scmp.ne.s32.totalorder %s255, %s257
      %p261 = scmp.eq.s32.totalorder %s18, 0
      %p262 = por %p260, %p261
      %p263 = scmp.ne.s32.totalorder %s255, %s257
      %p264 = scmp.eq.s32.totalorder %s23, 1
      %p265 = por %p263, %p264
      %p266 = scmp.ne.s32.totalorder %s257, %s258
      %p267 = scmp.eq.s32.totalorder %s23, 0
      %p268 = por %p266, %p267
      %p269 = scmp.ne.s32.totalorder %s257, %s258
      %p270 = scmp.eq.s32.totalorder %s24, 1
      %p271 = por %p269, %p270
      %p273 = scmp.ne.s32.totalorder %s258, %s272
      %p274 = scmp.eq.s32.totalorder %s24, 0
      %p275 = por %p273, %p274
      %p276 = scmp.le.s32.totalorder 1, %s18
      %p277 = scmp.lt.s32.totalorder %s18, 3
      %p278 = pnand %p276, %p277
      %p279 = pneg %p278
      // Predicated region
      $region9: #{convmixer_autoencoder_forward.6} parent=5 // pred_check
        _
      $region10: #{convmixer_autoencoder_forward.6} parent=5 // pred_check_branch
        %281 = sbr.rel (%p278) target = $region12
      $region11: #{convmixer_autoencoder_forward.6} parent=5 // pred_region
        %s282 = ssub.s32 %s18, 1
        // Predicated region
        $region13: #{convmixer_autoencoder_forward.6} parent=11 // pred_check
          %p283 = pneg %p39
        $region14: #{convmixer_autoencoder_forward.6} parent=11 // pred_check_branch
          %285 = sbr.rel (%p283) target = $region16
        $region15: #{convmixer_autoencoder_forward.6} parent=11 // pred_region
          _
        $region16: #{convmixer_autoencoder_forward.6} parent=11 // pred_fallthru
          _
      $region12: #{convmixer_autoencoder_forward.6} parent=5 // pred_fallthru
        _
      %p286 = scmp.lt.s32.totalorder %s18, 2
      // Predicated region
      $region17: #{convmixer_autoencoder_forward.6} parent=5 // pred_check
        %p287 = pneg %p286
      $region18: #{convmixer_autoencoder_forward.6} parent=5 // pred_check_branch
        %289 = sbr.rel (%p287) target = $region20
      $region19: #{convmixer_autoencoder_forward.6} parent=5 // pred_region
        // Predicated region
        $region21: #{convmixer_autoencoder_forward.6} parent=19 // pred_check
          %p290 = pneg %p59
        $region22: #{convmixer_autoencoder_forward.6} parent=19 // pred_check_branch
          %292 = sbr.rel (%p290) target = $region24
        $region23: #{convmixer_autoencoder_forward.6} parent=19 // pred_region
          %p293 = scmp.lt.s32.totalorder %s18, 1
          %s294 = scalar_select %p293, %s18, 1
          %s295 = smul.addr %s294, 4
          %s296 = scalar_lea.vmem %s1, %s295
        $region24: #{convmixer_autoencoder_forward.6} parent=19 // pred_fallthru
          _
        // Predicated region
        $region25: #{convmixer_autoencoder_forward.6} parent=19 // pred_check
          %p297 = pneg %p85
        $region26: #{convmixer_autoencoder_forward.6} parent=19 // pred_check_branch
          %299 = sbr.rel (%p297) target = $region28
        $region27: #{convmixer_autoencoder_forward.6} parent=19 // pred_region
          %p300 = scmp.lt.s32.totalorder %s18, 1
          %s301 = scalar_select %p300, %s18, 1
          %s302 = scalar_lea.vmem %s2, %s301
        $region28: #{convmixer_autoencoder_forward.6} parent=19 // pred_fallthru
          _
        // Predicated region
        $region29: #{convmixer_autoencoder_forward.6} parent=19 // pred_check
          %p303 = pneg %p111
        $region30: #{convmixer_autoencoder_forward.6} parent=19 // pred_check_branch
          %305 = sbr.rel (%p303) target = $region32
        $region31: #{convmixer_autoencoder_forward.6} parent=19 // pred_region
          %p306 = scmp.lt.s32.totalorder %s18, 1
          %s307 = scalar_select %p306, %s18, 1
          %s308 = scalar_lea.vmem %s3, %s307
        $region32: #{convmixer_autoencoder_forward.6} parent=19 // pred_fallthru
          _
        // Predicated region
        $region33: #{convmixer_autoencoder_forward.6} parent=19 // pred_check
          %p309 = pneg %p137
        $region34: #{convmixer_autoencoder_forward.6} parent=19 // pred_check_branch
          %311 = sbr.rel (%p309) target = $region36
        $region35: #{convmixer_autoencoder_forward.6} parent=19 // pred_region
          %p312 = scmp.lt.s32.totalorder %s18, 1
          %s313 = scalar_select %p312, %s18, 1
          %s314 = scalar_lea.vmem %s4, %s313
        $region36: #{convmixer_autoencoder_forward.6} parent=19 // pred_fallthru
          _
        // Predicated region
        $region37: #{convmixer_autoencoder_forward.6} parent=19 // pred_check
          %p315 = pneg %p163
        $region38: #{convmixer_autoencoder_forward.6} parent=19 // pred_check_branch
          %317 = sbr.rel (%p315) target = $region40
        $region39: #{convmixer_autoencoder_forward.6} parent=19 // pred_region
          %s318 = sand.u32 %s153, 1
          %s319 = scalar_lea.sflag [#allocation4], %s318
          %s320 = sand.u32 %s153, 1
          %s321 = smul.addr %s320, 64
          %s322 = scalar_lea.vmem [#allocation3], %s321
          %324 = vsyncadd %s319, 0
          %s325 = smul.addr %s18, 16
          %s326 = smul.addr %s325, 4
          %s327 = scalar_lea.hbm %s5, %s326
          %s328 = sshll.u32 %s327, 4
          %s329 = int_to_ptr.hbm [resolvable:$true] %s328
          %s330 = sshll.u32 %s322, 4
          %s331 = int_to_ptr.vmem [resolvable:$true] %s330
          %336 = dma.hbm_to_vmem [thread:$0]  %s329, 1024, %s331, %s319, 64, 64, 4
        $region40: #{convmixer_autoencoder_forward.6} parent=19 // pred_fallthru
          _
        // Predicated region
        $region41: #{convmixer_autoencoder_forward.6} parent=19 // pred_check
          %p337 = pneg %p189
        $region42: #{convmixer_autoencoder_forward.6} parent=19 // pred_check_branch
          %339 = sbr.rel (%p337) target = $region44
        $region43: #{convmixer_autoencoder_forward.6} parent=19 // pred_region
          %p340 = scmp.lt.s32.totalorder %s18, 1
          %s341 = scalar_select %p340, %s18, 1
          %s342 = scalar_lea.vmem %s6, %s341
        $region44: #{convmixer_autoencoder_forward.6} parent=19 // pred_fallthru
          _
        // Predicated region
        $region45: #{convmixer_autoencoder_forward.6} parent=19 // pred_check
          %p343 = pneg %p215
        $region46: #{convmixer_autoencoder_forward.6} parent=19 // pred_check_branch
          %345 = sbr.rel (%p343) target = $region48
        $region47: #{convmixer_autoencoder_forward.6} parent=19 // pred_region
          %p346 = scmp.lt.s32.totalorder %s18, 1
          %s347 = scalar_select %p346, %s18, 1
          %s348 = scalar_lea.vmem %s7, %s347
        $region48: #{convmixer_autoencoder_forward.6} parent=19 // pred_fallthru
          _
        // Predicated region
        $region49: #{convmixer_autoencoder_forward.6} parent=19 // pred_check
          %p349 = pneg %p241
        $region50: #{convmixer_autoencoder_forward.6} parent=19 // pred_check_branch
          %351 = sbr.rel (%p349) target = $region52
        $region51: #{convmixer_autoencoder_forward.6} parent=19 // pred_region
          %p352 = scmp.lt.s32.totalorder %s18, 1
          %s353 = scalar_select %p352, %s18, 1
          %s354 = scalar_lea.vmem %s8, %s353
        $region52: #{convmixer_autoencoder_forward.6} parent=19 // pred_fallthru
          _
      $region20: #{convmixer_autoencoder_forward.6} parent=5 // pred_fallthru
        _
      %p355 = scmp.le.s32.totalorder 1, %s18
      %p356 = scmp.lt.s32.totalorder %s18, 3
      %p357 = pnand %p355, %p356
      %p358 = pneg %p357
      // Predicated region
      $region53: #{convmixer_autoencoder_forward.6} parent=5 // pred_check
        _
      $region54: #{convmixer_autoencoder_forward.6} parent=5 // pred_check_branch
        %360 = sbr.rel (%p357) target = $region56
      $region55: #{convmixer_autoencoder_forward.6} parent=5 // pred_region
        %s361 = ssub.s32 %s18, 1
        %s362 = sand.u32 %s156, 1
        %s363 = scalar_lea.sflag [#allocation4], %s362
        %s364 = sand.u32 %s156, 1
        %s365 = smul.addr %s364, 64
        %s366 = scalar_lea.vmem [#allocation3], %s365
        // Predicated region
        $region57: #{convmixer_autoencoder_forward.6} parent=55 // pred_check
          %p367 = pneg %p169
        $region58: #{convmixer_autoencoder_forward.6} parent=55 // pred_check_branch
          %369 = sbr.rel (%p367) target = $region60
        $region59: #{convmixer_autoencoder_forward.6} parent=55 // pred_region
          %371 = dma.done %s363, 1024
        $region60: #{convmixer_autoencoder_forward.6} parent=55 // pred_fallthru
          _
        %p372 = pneg %p39
        %p373 = pneg %p36
        %p374 = scmp.lt.s32.totalorder %s23, 1
        %s375 = scalar_select %p374, %s23, 1
        %s376 = smul.addr %s375, 4
        %s377 = scalar_lea.vmem %s1, %s376
        %p378 = pneg %p65
        %p379 = pneg %p62
        %p380 = scmp.lt.s32.totalorder %s23, 1
        %s381 = scalar_select %p380, %s23, 1
        %s382 = scalar_lea.vmem %s2, %s381
        %p383 = pneg %p91
        %p384 = pneg %p88
        %p385 = scmp.lt.s32.totalorder %s23, 1
        %s386 = scalar_select %p385, %s23, 1
        %s387 = scalar_lea.vmem %s3, %s386
        %p388 = pneg %p117
        %p389 = pneg %p114
        %p390 = scmp.lt.s32.totalorder %s23, 1
        %s391 = scalar_select %p390, %s23, 1
        %s392 = scalar_lea.vmem %s4, %s391
        %p393 = pneg %p143
        %p394 = pneg %p140
        %s395 = sand.u32 %s156, 1
        %s396 = scalar_lea.sflag [#allocation4], %s395
        %s397 = sand.u32 %s156, 1
        %s398 = smul.addr %s397, 64
        %s399 = scalar_lea.vmem [#allocation3], %s398
        %p400 = pneg %p169
        %p401 = pneg %p166
        %p402 = scmp.lt.s32.totalorder %s23, 1
        %s403 = scalar_select %p402, %s23, 1
        %s404 = scalar_lea.vmem %s6, %s403
        %p405 = pneg %p195
        %p406 = pneg %p192
        %p407 = scmp.lt.s32.totalorder %s23, 1
        %s408 = scalar_select %p407, %s23, 1
        %s409 = scalar_lea.vmem %s7, %s408
        %p410 = pneg %p221
        %p411 = pneg %p218
        %p412 = scmp.lt.s32.totalorder %s23, 1
        %s413 = scalar_select %p412, %s23, 1
        %s414 = scalar_lea.vmem %s8, %s413
        %p415 = pneg %p247
        %p416 = pneg %p244
        %p417 = pneg %p268
        %p418 = pneg %p265
        %p419 = scmp.lt.s32.totalorder %s23, 1
        %s420 = scalar_select %p419, %s23, 1
        %s421 = smul.addr %s420, 4
        %s422 = scalar_lea.vmem %s1, %s421
        %p423 = scmp.lt.s32.totalorder %s23, 1
        %s424 = scalar_select %p423, %s23, 1
        %s425 = scalar_lea.vmem %s2, %s424
        %p426 = scmp.lt.s32.totalorder %s23, 1
        %s427 = scalar_select %p426, %s23, 1
        %s428 = scalar_lea.vmem %s3, %s427
        %p429 = scmp.lt.s32.totalorder %s23, 1
        %s430 = scalar_select %p429, %s23, 1
        %s431 = scalar_lea.vmem %s4, %s430
        %p432 = scmp.lt.s32.totalorder %s23, 1
        %s433 = scalar_select %p432, %s23, 1
        %s434 = scalar_lea.vmem %s6, %s433
        %p435 = scmp.lt.s32.totalorder %s23, 1
        %s436 = scalar_select %p435, %s23, 1
        %s437 = scalar_lea.vmem %s7, %s436
        %p438 = scmp.lt.s32.totalorder %s23, 1
        %s439 = scalar_select %p438, %s23, 1
        %s440 = scalar_lea.vmem %s8, %s439
        %p441 = scmp.eq.s32.totalorder %s23, 0
        // Predicated region
        $region61: #{convmixer_autoencoder_forward.6} parent=55 // pred_check
          %p442 = pneg %p441
        $region62: #{convmixer_autoencoder_forward.6} parent=55 // pred_check_branch
          %444 = sbr.rel (%p442) target = $region64
        $region63: #{convmixer_autoencoder_forward.6} parent=55 // pred_region
          %445 = vst [vmem:[#allocation2] sm:$0xff] 0.0
          %446 = vst [vmem:[#allocation2 + $0x8] sm:$0xff] 0.0
          %447 = vst [vmem:[#allocation2 + $0x10] sm:$0x3] 0.0
          %448 = vst [vmem:[#allocation2 + $0x18] sm:$0xff] 0.0
          %449 = vst [vmem:[#allocation2 + $0x20] sm:$0xff] 0.0
          %450 = vst [vmem:[#allocation2 + $0x28] sm:$0x3] 0.0
          %v451 = vld [vmem:[%s0] sm:$0xff]
          %v452 = vld [vmem:[%s0 + $0x8] sm:$0xff]
          %v453 = vld [vmem:[%s0 + $0x10] sm:$0xff]
          %v454 = vld [vmem:[%s0 + $0x18] sm:$0xff]
          %455 = vst [vmem:[#allocation2 + $0x1] sm:$0xff] %v451
          %456 = vst [vmem:[#allocation2 + $0x9] sm:$0xff] %v452
          %457 = vst [vmem:[#allocation2 + $0x19] sm:$0xff] %v453
          %458 = vst [vmem:[#allocation2 + $0x21] sm:$0xff] %v454
        $region64: #{convmixer_autoencoder_forward.6} parent=55 // pred_fallthru
          _
        %v459 = vld [vmem:[#allocation2 + $0x1] sm:$0xff]
        %v460 = vld [vmem:[#allocation2 + $0x9] sm:$0xff]
        %v461 = vld [vmem:[#allocation2 + $0x19] sm:$0xff]
        %v462 = vld [vmem:[#allocation2 + $0x21] sm:$0xff]
        %v463 = vld [vmem:[#allocation2] sm:$0xff]
        %v464 = vld [vmem:[#allocation2 + $0x8] sm:$0xff]
        %v465 = vld [vmem:[#allocation2 + $0x18] sm:$0xff]
        %v466 = vld [vmem:[#allocation2 + $0x20] sm:$0xff]
        %v467 = vld [vmem:[%s422] sm:$0x1]
        %v468 = vperm.slane %v467, 0
        %v469 = vmul.f32 %v463, %v468
        %v470 = vmul.f32 %v464, %v468
        %v471 = vmul.f32 %v465, %v468
        %v472 = vmul.f32 %v466, %v468
        %v473 = vld [vmem:[%s422 + $0x1] sm:$0x1]
        %v474 = vperm.slane %v473, 0
        %v475 = vmul.f32 %v459, %v474
        %v476 = vmul.f32 %v460, %v474
        %v477 = vmul.f32 %v461, %v474
        %v478 = vmul.f32 %v462, %v474
        %v479 = vadd.f32 %v469, %v475
        %v480 = vadd.f32 %v470, %v476
        %v481 = vadd.f32 %v471, %v477
        %v482 = vadd.f32 %v472, %v478
        %v483 = vld [vmem:[#allocation2 + $0x2] sm:$0xff]
        %v484 = vld [vmem:[#allocation2 + $0xa] sm:$0xff]
        %v485 = vld [vmem:[#allocation2 + $0x1a] sm:$0xff]
        %v486 = vld [vmem:[#allocation2 + $0x22] sm:$0xff]
        %v487 = vld [vmem:[%s422 + $0x2] sm:$0x1]
        %v488 = vperm.slane %v487, 0
        %v489 = vmul.f32 %v483, %v488
        %v490 = vmul.f32 %v484, %v488
        %v491 = vmul.f32 %v485, %v488
        %v492 = vmul.f32 %v486, %v488
        %v493 = vadd.f32 %v479, %v489
        %v494 = vadd.f32 %v480, %v490
        %v495 = vadd.f32 %v481, %v491
        %v496 = vadd.f32 %v482, %v492
        %v497 = vld [vmem:[%s425] sm:$0x1]
        %v499 = vperm.slane %v497, 0
        %v501 = vadd.f32 %v493, %v499
        %v502 = vadd.f32 %v494, %v499
        %v503 = vadd.f32 %v495, %v499
        %v504 = vadd.f32 %v496, %v499
        %v505 = vmul.f32 %v501, 0.5
        %v506 = vmul.f32 %v502, 0.5
        %v507 = vmul.f32 %v503, 0.5
        %v508 = vmul.f32 %v504, 0.5
        %v509 = vmul.f32 %v501, 0.70710677
        %v510 = vmul.f32 %v502, 0.70710677
        %v511 = vmul.f32 %v503, 0.70710677
        %v512 = vmul.f32 %v504, 0.70710677
        %v513 = vmul.f32 %v509, %v509
        %v514 = vmin.f32 16.0, %v513
        %v515 = vmul.f32 %v514, 2.1237322e-06
        %v516 = vadd.f32 %v515, 0.00028619796
        %v517 = vmul.f32 %v514, %v516
        %v518 = vadd.f32 %v517, 0.0036580483
        %v519 = vmul.f32 %v514, %v518
        %v520 = vadd.f32 %v519, 0.05243302
        %v521 = vmul.f32 %v514, %v520
        %v522 = vadd.f32 %v521, 0.18741608
        %v523 = vmul.f32 %v514, %v522
        %v524 = vadd.f32 %v523, 1.1283791
        %v525 = vmul.f32 %v509, %v524
        %v526 = vmul.f32 %v514, 3.8918573e-05
        %v527 = vadd.f32 %v526, 0.001143296
        %v528 = vmul.f32 %v514, %v527
        %v529 = vadd.f32 %v528, 0.014752088
        %v530 = vmul.f32 %v514, %v529
        %v531 = vadd.f32 %v530, 0.112945676
        %v532 = vmul.f32 %v514, %v531
        %v533 = vadd.f32 %v532, 0.4994258
        %v534 = vmul.f32 %v514, %v533
        %v535 = vadd.f32 %v534, 1.0
        %v536 = vrcp.pop %v535
        %v537 = vmul.f32 %v535, %v536
        %v538 = vsub.f32 1.0, %v537
        %v539 = vmul.f32 %v536, %v538
        %v540 = vadd.f32 %v536, %v539
        %vm541 = vweird.f32 %v535
        %vm542 = vweird.f32 %v536
        %vm543 = vmor %vm541, %vm542
        %v544 = vsel %vm543, %v536, %v540
        %v545 = vand.u32 2147483647, %v535
        %vm546 = vcmp.eq.f32.partialorder %v545, 8.507059e+37
        %v547 = vand.u32 %v535, 2147483648
        %v548 = vor.u32 1.1754944e-38, %v547
        %v549 = vsel %vm546, %v548, %v544
        %v550 = vmul.f32 %v525, %v549
        %v551 = vmin.f32 %v550, 1.0
        %v552 = vmax.f32 %v551, -1.0
        %v553 = vmul.f32 %v510, %v510
        %v554 = vmin.f32 16.0, %v553
        %v555 = vmul.f32 %v554, 2.1237322e-06
        %v556 = vadd.f32 %v555, 0.00028619796
        %v557 = vmul.f32 %v554, %v556
        %v558 = vadd.f32 %v557, 0.0036580483
        %v559 = vmul.f32 %v554, %v558
        %v560 = vadd.f32 %v559, 0.05243302
        %v561 = vmul.f32 %v554, %v560
        %v562 = vadd.f32 %v561, 0.18741608
        %v563 = vmul.f32 %v554, %v562
        %v564 = vadd.f32 %v563, 1.1283791
        %v565 = vmul.f32 %v510, %v564
        %v566 = vmul.f32 %v554, 3.8918573e-05
        %v567 = vadd.f32 %v566, 0.001143296
        %v568 = vmul.f32 %v554, %v567
        %v569 = vadd.f32 %v568, 0.014752088
        %v570 = vmul.f32 %v554, %v569
        %v571 = vadd.f32 %v570, 0.112945676
        %v572 = vmul.f32 %v554, %v571
        %v573 = vadd.f32 %v572, 0.4994258
        %v574 = vmul.f32 %v554, %v573
        %v575 = vadd.f32 %v574, 1.0
        %v576 = vrcp.pop %v575
        %v577 = vmul.f32 %v575, %v576
        %v578 = vsub.f32 1.0, %v577
        %v579 = vmul.f32 %v576, %v578
        %v580 = vadd.f32 %v576, %v579
        %vm581 = vweird.f32 %v575
        %vm582 = vweird.f32 %v576
        %vm583 = vmor %vm581, %vm582
        %v584 = vsel %vm583, %v576, %v580
        %v585 = vand.u32 2147483647, %v575
        %vm586 = vcmp.eq.f32.partialorder %v585, 8.507059e+37
        %v587 = vand.u32 %v575, 2147483648
        %v588 = vor.u32 1.1754944e-38, %v587
        %v589 = vsel %vm586, %v588, %v584
        %v590 = vmul.f32 %v565, %v589
        %v591 = vmin.f32 %v590, 1.0
        %v592 = vmax.f32 %v591, -1.0
        %v593 = vmul.f32 %v511, %v511
        %v594 = vmin.f32 16.0, %v593
        %v595 = vmul.f32 %v594, 2.1237322e-06
        %v596 = vadd.f32 %v595, 0.00028619796
        %v597 = vmul.f32 %v594, %v596
        %v598 = vadd.f32 %v597, 0.0036580483
        %v599 = vmul.f32 %v594, %v598
        %v600 = vadd.f32 %v599, 0.05243302
        %v601 = vmul.f32 %v594, %v600
        %v602 = vadd.f32 %v601, 0.18741608
        %v603 = vmul.f32 %v594, %v602
        %v604 = vadd.f32 %v603, 1.1283791
        %v605 = vmul.f32 %v511, %v604
        %v606 = vmul.f32 %v594, 3.8918573e-05
        %v607 = vadd.f32 %v606, 0.001143296
        %v608 = vmul.f32 %v594, %v607
        %v609 = vadd.f32 %v608, 0.014752088
        %v610 = vmul.f32 %v594, %v609
        %v611 = vadd.f32 %v610, 0.112945676
        %v612 = vmul.f32 %v594, %v611
        %v613 = vadd.f32 %v612, 0.4994258
        %v614 = vmul.f32 %v594, %v613
        %v615 = vadd.f32 %v614, 1.0
        %v616 = vrcp.pop %v615
        %v617 = vmul.f32 %v615, %v616
        %v618 = vsub.f32 1.0, %v617
        %v619 = vmul.f32 %v616, %v618
        %v620 = vadd.f32 %v616, %v619
        %vm621 = vweird.f32 %v615
        %vm622 = vweird.f32 %v616
        %vm623 = vmor %vm621, %vm622
        %v624 = vsel %vm623, %v616, %v620
        %v625 = vand.u32 2147483647, %v615
        %vm626 = vcmp.eq.f32.partialorder %v625, 8.507059e+37
        %v627 = vand.u32 %v615, 2147483648
        %v628 = vor.u32 1.1754944e-38, %v627
        %v629 = vsel %vm626, %v628, %v624
        %v630 = vmul.f32 %v605, %v629
        %v631 = vmin.f32 %v630, 1.0
        %v632 = vmax.f32 %v631, -1.0
        %v633 = vmul.f32 %v512, %v512
        %v634 = vmin.f32 16.0, %v633
        %v635 = vmul.f32 %v634, 2.1237322e-06
        %v636 = vadd.f32 %v635, 0.00028619796
        %v637 = vmul.f32 %v634, %v636
        %v638 = vadd.f32 %v637, 0.0036580483
        %v639 = vmul.f32 %v634, %v638
        %v640 = vadd.f32 %v639, 0.05243302
        %v641 = vmul.f32 %v634, %v640
        %v642 = vadd.f32 %v641, 0.18741608
        %v643 = vmul.f32 %v634, %v642
        %v644 = vadd.f32 %v643, 1.1283791
        %v645 = vmul.f32 %v512, %v644
        %v646 = vmul.f32 %v634, 3.8918573e-05
        %v647 = vadd.f32 %v646, 0.001143296
        %v648 = vmul.f32 %v634, %v647
        %v649 = vadd.f32 %v648, 0.014752088
        %v650 = vmul.f32 %v634, %v649
        %v651 = vadd.f32 %v650, 0.112945676
        %v652 = vmul.f32 %v634, %v651
        %v653 = vadd.f32 %v652, 0.4994258
        %v654 = vmul.f32 %v634, %v653
        %v655 = vadd.f32 %v654, 1.0
        %v656 = vrcp.pop %v655
        %v657 = vmul.f32 %v655, %v656
        %v658 = vsub.f32 1.0, %v657
        %v659 = vmul.f32 %v656, %v658
        %v660 = vadd.f32 %v656, %v659
        %vm661 = vweird.f32 %v655
        %vm662 = vweird.f32 %v656
        %vm663 = vmor %vm661, %vm662
        %v664 = vsel %vm663, %v656, %v660
        %v665 = vand.u32 2147483647, %v655
        %vm666 = vcmp.eq.f32.partialorder %v665, 8.507059e+37
        %v667 = vand.u32 %v655, 2147483648
        %v668 = vor.u32 1.1754944e-38, %v667
        %v669 = vsel %vm666, %v668, %v664
        %v670 = vmul.f32 %v645, %v669
        %v671 = vmin.f32 %v670, 1.0
        %v672 = vmax.f32 %v671, -1.0
        %v673 = vadd.f32 %v552, 1.0
        %v674 = vadd.f32 %v592, 1.0
        %v675 = vadd.f32 %v632, 1.0
        %v676 = vadd.f32 %v672, 1.0
        %v677 = vmul.f32 %v505, %v673
        %v678 = vmul.f32 %v506, %v674
        %v679 = vmul.f32 %v507, %v675
        %v680 = vmul.f32 %v508, %v676
        %v681 = vld [vmem:[%s428] sm:$0x1]
        %v682 = vld [vmem:[%s431] sm:$0x1]
        %v683 = vadd.f32 %v677, %v678
        %v684 = vadd.f32 %v683, %v679
        %v685 = vadd.f32 %v684, %v680
        %v686 = vrot.slane %v685, 4
        %v687 = vadd.f32 %v685, %v686
        %v688 = vrot.slane %v687, 2
        %v689 = vadd.f32 %v687, %v688
        %v690 = vrot.slane %v689, 1
        %v691 = vadd.f32 %v689, %v690
        %v692 = vmul.f32 %v691, 0.03125
        %v693 = vmul.f32 %v677, %v677
        %v694 = vmul.f32 %v678, %v678
        %v695 = vmul.f32 %v679, %v679
        %v696 = vmul.f32 %v680, %v680
        %v697 = vadd.f32 %v693, %v694
        %v698 = vadd.f32 %v697, %v695
        %v699 = vadd.f32 %v698, %v696
        %v700 = vrot.slane %v699, 4
        %v701 = vadd.f32 %v699, %v700
        %v702 = vrot.slane %v701, 2
        %v703 = vadd.f32 %v701, %v702
        %v704 = vrot.slane %v703, 1
        %v705 = vadd.f32 %v703, %v704
        %v706 = vmul.f32 %v705, 0.03125
        %v707 = vmul.f32 %v692, %v692
        %v708 = vsub.f32 %v706, %v707
        %v709 = vmax.f32 %v708, 0.0
        %v710 = vsub.f32 %v677, %v692
        %v711 = vsub.f32 %v678, %v692
        %v712 = vsub.f32 %v679, %v692
        %v713 = vsub.f32 %v680, %v692
        %v714 = vadd.f32 %v709, 1e-05
        %v715 = vrsqrt.pop %v714
        %v716 = vmul.f32 %v715, %v714
        %v717 = vmul.f32 %v716, %v715
        %v718 = vmul.f32 0.5, %v717
        %v719 = vsub.f32 1.5, %v718
        %v720 = vmul.f32 %v715, %v719
        %vm721 = vweird.f32 %v714
        %vm722 = vweird.f32 %v715
        %vm723 = vmor %vm721, %vm722
        %v724 = vsel %vm723, %v715, %v720
        %v725 = vmul.f32 %v710, %v724
        %v726 = vmul.f32 %v711, %v724
        %v727 = vmul.f32 %v712, %v724
        %v728 = vmul.f32 %v713, %v724
        %v730 = vperm.slane %v681, 0
        %v732 = vmul.f32 %v725, %v730
        %v733 = vmul.f32 %v726, %v730
        %v734 = vmul.f32 %v727, %v730
        %v735 = vmul.f32 %v728, %v730
        %v737 = vperm.slane %v682, 0
        %v739 = vadd.f32 %v732, %v737
        %v740 = vadd.f32 %v733, %v737
        %v741 = vadd.f32 %v734, %v737
        %v742 = vadd.f32 %v735, %v737
        %v743 = vadd.f32 %v739, %v459
        %v744 = vadd.f32 %v740, %v460
        %v745 = vadd.f32 %v741, %v461
        %v746 = vadd.f32 %v742, %v462
        %v747 = vpack.c.bf16 %v744, %v743
        %v748 = vpack.c.bf16 %v746, %v745
        %v749 = vld [vmem:[%s366] sm:$0xf]
        %v750 = vld [vmem:[%s366 + $0x4] sm:$0xf]
        %v751 = vld [vmem:[%s366 + $0x8] sm:$0xf]
        %v752 = vld [vmem:[%s366 + $0xc] sm:$0xf]
        %v753 = vld [vmem:[%s366 + $0x10] sm:$0xf]
        %v754 = vld [vmem:[%s366 + $0x14] sm:$0xf]
        %v755 = vld [vmem:[%s366 + $0x18] sm:$0xf]
        %v756 = vld [vmem:[%s366 + $0x1c] sm:$0xf]
        %v757 = vld [vmem:[%s366 + $0x20] sm:$0xf]
        %v758 = vld [vmem:[%s366 + $0x24] sm:$0xf]
        %v759 = vld [vmem:[%s366 + $0x28] sm:$0xf]
        %v760 = vld [vmem:[%s366 + $0x2c] sm:$0xf]
        %v761 = vld [vmem:[%s366 + $0x30] sm:$0xf]
        %v762 = vld [vmem:[%s366 + $0x34] sm:$0xf]
        %v763 = vld [vmem:[%s366 + $0x38] sm:$0xf]
        %v764 = vld [vmem:[%s366 + $0x3c] sm:$0xf]
        %v765 = vld [vmem:[%s434] sm:$0x1]
        %v767 = vperm.slane %v765, 0
        %v785 = vunpack.c.l.b16 %v749
        %v786 = vunpack.c.l.b16 %v750
        %v787 = vunpack.c.l.b16 %v751
        %v788 = vunpack.c.l.b16 %v752
        %v789 = vunpack.c.l.b16 %v753
        %v790 = vunpack.c.l.b16 %v754
        %v791 = vunpack.c.l.b16 %v755
        %v792 = vunpack.c.l.b16 %v756
        %v793 = vunpack.c.l.b16 %v757
        %v794 = vunpack.c.l.b16 %v758
        %v795 = vunpack.c.l.b16 %v759
        %v796 = vunpack.c.l.b16 %v760
        %v797 = vunpack.c.l.b16 %v761
        %v798 = vunpack.c.l.b16 %v762
        %v799 = vunpack.c.l.b16 %v763
        %v800 = vunpack.c.l.b16 %v764
        %v801 = vpack.c.b16 %v786, %v785
        %v802 = vpack.c.b16 %v788, %v787
        %v803 = vpack.c.b16 %v790, %v789
        %v804 = vpack.c.b16 %v792, %v791
        %v805 = vpack.c.b16 %v794, %v793
        %v806 = vpack.c.b16 %v796, %v795
        %v807 = vpack.c.b16 %v798, %v797
        %v808 = vpack.c.b16 %v800, %v799
        %817 = vmatpush.bf16.msra.mxu0 %v808
        %818 = vmatpush.bf16.msra.mxu0 %v807
        %819 = vmatpush.bf16.msra.mxu0 %v806
        %820 = vmatpush.bf16.msra.mxu0 %v805
        %821 = vmatpush.bf16.msra.mxu0 %v804
        %822 = vmatpush.bf16.msra.mxu0 %v803
        %823 = vmatpush.bf16.msra.mxu0 %v802
        %824 = vmatpush.bf16.msra.mxu0 %v801
        %825 = vmatmul.bf16.gmra.mxu0 %v747
        %v826 = vpop.f32.mrf.mxu0
        %v827 = vadd.f32 %v767, %v826
        %v828 = vpop.f32.mrf.mxu0
        %v829 = vadd.f32 %v767, %v828
        %830 = vmatmul.bf16.gmra.mxu0 %v748
        %v831 = vpop.f32.mrf.mxu0
        %v832 = vadd.f32 %v767, %v831
        %v833 = vpop.f32.mrf.mxu0
        %v834 = vadd.f32 %v767, %v833
        %835 = vdwg.mxu0
        %v836 = vmul.f32 %v827, 0.5
        %v837 = vmul.f32 %v829, 0.5
        %v838 = vmul.f32 %v832, 0.5
        %v839 = vmul.f32 %v834, 0.5
        %v840 = vmul.f32 %v827, 0.70710677
        %v841 = vmul.f32 %v829, 0.70710677
        %v842 = vmul.f32 %v832, 0.70710677
        %v843 = vmul.f32 %v834, 0.70710677
        %v844 = vmul.f32 %v840, %v840
        %v845 = vmin.f32 16.0, %v844
        %v846 = vmul.f32 %v845, 2.1237322e-06
        %v847 = vadd.f32 %v846, 0.00028619796
        %v848 = vmul.f32 %v845, %v847
        %v849 = vadd.f32 %v848, 0.0036580483
        %v850 = vmul.f32 %v845, %v849
        %v851 = vadd.f32 %v850, 0.05243302
        %v852 = vmul.f32 %v845, %v851
        %v853 = vadd.f32 %v852, 0.18741608
        %v854 = vmul.f32 %v845, %v853
        %v855 = vadd.f32 %v854, 1.1283791
        %v856 = vmul.f32 %v840, %v855
        %v857 = vmul.f32 %v845, 3.8918573e-05
        %v858 = vadd.f32 %v857, 0.001143296
        %v859 = vmul.f32 %v845, %v858
        %v860 = vadd.f32 %v859, 0.014752088
        %v861 = vmul.f32 %v845, %v860
        %v862 = vadd.f32 %v861, 0.112945676
        %v863 = vmul.f32 %v845, %v862
        %v864 = vadd.f32 %v863, 0.4994258
        %v865 = vmul.f32 %v845, %v864
        %v866 = vadd.f32 %v865, 1.0
        %v867 = vrcp.pop %v866
        %v868 = vmul.f32 %v866, %v867
        %v869 = vsub.f32 1.0, %v868
        %v870 = vmul.f32 %v867, %v869
        %v871 = vadd.f32 %v867, %v870
        %vm872 = vweird.f32 %v866
        %vm873 = vweird.f32 %v867
        %vm874 = vmor %vm872, %vm873
        %v875 = vsel %vm874, %v867, %v871
        %v876 = vand.u32 2147483647, %v866
        %vm877 = vcmp.eq.f32.partialorder %v876, 8.507059e+37
        %v878 = vand.u32 %v866, 2147483648
        %v879 = vor.u32 1.1754944e-38, %v878
        %v880 = vsel %vm877, %v879, %v875
        %v881 = vmul.f32 %v856, %v880
        %v882 = vmin.f32 %v881, 1.0
        %v883 = vmax.f32 %v882, -1.0
        %v884 = vmul.f32 %v841, %v841
        %v885 = vmin.f32 16.0, %v884
        %v886 = vmul.f32 %v885, 2.1237322e-06
        %v887 = vadd.f32 %v886, 0.00028619796
        %v888 = vmul.f32 %v885, %v887
        %v889 = vadd.f32 %v888, 0.0036580483
        %v890 = vmul.f32 %v885, %v889
        %v891 = vadd.f32 %v890, 0.05243302
        %v892 = vmul.f32 %v885, %v891
        %v893 = vadd.f32 %v892, 0.18741608
        %v894 = vmul.f32 %v885, %v893
        %v895 = vadd.f32 %v894, 1.1283791
        %v896 = vmul.f32 %v841, %v895
        %v897 = vmul.f32 %v885, 3.8918573e-05
        %v898 = vadd.f32 %v897, 0.001143296
        %v899 = vmul.f32 %v885, %v898
        %v900 = vadd.f32 %v899, 0.014752088
        %v901 = vmul.f32 %v885, %v900
        %v902 = vadd.f32 %v901, 0.112945676
        %v903 = vmul.f32 %v885, %v902
        %v904 = vadd.f32 %v903, 0.4994258
        %v905 = vmul.f32 %v885, %v904
        %v906 = vadd.f32 %v905, 1.0
        %v907 = vrcp.pop %v906
        %v908 = vmul.f32 %v906, %v907
        %v909 = vsub.f32 1.0, %v908
        %v910 = vmul.f32 %v907, %v909
        %v911 = vadd.f32 %v907, %v910
        %vm912 = vweird.f32 %v906
        %vm913 = vweird.f32 %v907
        %vm914 = vmor %vm912, %vm913
        %v915 = vsel %vm914, %v907, %v911
        %v916 = vand.u32 2147483647, %v906
        %vm917 = vcmp.eq.f32.partialorder %v916, 8.507059e+37
        %v918 = vand.u32 %v906, 2147483648
        %v919 = vor.u32 1.1754944e-38, %v918
        %v920 = vsel %vm917, %v919, %v915
        %v921 = vmul.f32 %v896, %v920
        %v922 = vmin.f32 %v921, 1.0
        %v923 = vmax.f32 %v922, -1.0
        %v924 = vmul.f32 %v842, %v842
        %v925 = vmin.f32 16.0, %v924
        %v926 = vmul.f32 %v925, 2.1237322e-06
        %v927 = vadd.f32 %v926, 0.00028619796
        %v928 = vmul.f32 %v925, %v927
        %v929 = vadd.f32 %v928, 0.0036580483
        %v930 = vmul.f32 %v925, %v929
        %v931 = vadd.f32 %v930, 0.05243302
        %v932 = vmul.f32 %v925, %v931
        %v933 = vadd.f32 %v932, 0.18741608
        %v934 = vmul.f32 %v925, %v933
        %v935 = vadd.f32 %v934, 1.1283791
        %v936 = vmul.f32 %v842, %v935
        %v937 = vmul.f32 %v925, 3.8918573e-05
        %v938 = vadd.f32 %v937, 0.001143296
        %v939 = vmul.f32 %v925, %v938
        %v940 = vadd.f32 %v939, 0.014752088
        %v941 = vmul.f32 %v925, %v940
        %v942 = vadd.f32 %v941, 0.112945676
        %v943 = vmul.f32 %v925, %v942
        %v944 = vadd.f32 %v943, 0.4994258
        %v945 = vmul.f32 %v925, %v944
        %v946 = vadd.f32 %v945, 1.0
        %v947 = vrcp.pop %v946
        %v948 = vmul.f32 %v946, %v947
        %v949 = vsub.f32 1.0, %v948
        %v950 = vmul.f32 %v947, %v949
        %v951 = vadd.f32 %v947, %v950
        %vm952 = vweird.f32 %v946
        %vm953 = vweird.f32 %v947
        %vm954 = vmor %vm952, %vm953
        %v955 = vsel %vm954, %v947, %v951
        %v956 = vand.u32 2147483647, %v946
        %vm957 = vcmp.eq.f32.partialorder %v956, 8.507059e+37
        %v958 = vand.u32 %v946, 2147483648
        %v959 = vor.u32 1.1754944e-38, %v958
        %v960 = vsel %vm957, %v959, %v955
        %v961 = vmul.f32 %v936, %v960
        %v962 = vmin.f32 %v961, 1.0
        %v963 = vmax.f32 %v962, -1.0
        %v964 = vmul.f32 %v843, %v843
        %v965 = vmin.f32 16.0, %v964
        %v966 = vmul.f32 %v965, 2.1237322e-06
        %v967 = vadd.f32 %v966, 0.00028619796
        %v968 = vmul.f32 %v965, %v967
        %v969 = vadd.f32 %v968, 0.0036580483
        %v970 = vmul.f32 %v965, %v969
        %v971 = vadd.f32 %v970, 0.05243302
        %v972 = vmul.f32 %v965, %v971
        %v973 = vadd.f32 %v972, 0.18741608
        %v974 = vmul.f32 %v965, %v973
        %v975 = vadd.f32 %v974, 1.1283791
        %v976 = vmul.f32 %v843, %v975
        %v977 = vmul.f32 %v965, 3.8918573e-05
        %v978 = vadd.f32 %v977, 0.001143296
        %v979 = vmul.f32 %v965, %v978
        %v980 = vadd.f32 %v979, 0.014752088
        %v981 = vmul.f32 %v965, %v980
        %v982 = vadd.f32 %v981, 0.112945676
        %v983 = vmul.f32 %v965, %v982
        %v984 = vadd.f32 %v983, 0.4994258
        %v985 = vmul.f32 %v965, %v984
        %v986 = vadd.f32 %v985, 1.0
        %v987 = vrcp.pop %v986
        %v988 = vmul.f32 %v986, %v987
        %v989 = vsub.f32 1.0, %v988
        %v990 = vmul.f32 %v987, %v989
        %v991 = vadd.f32 %v987, %v990
        %vm992 = vweird.f32 %v986
        %vm993 = vweird.f32 %v987
        %vm994 = vmor %vm992, %vm993
        %v995 = vsel %vm994, %v987, %v991
        %v996 = vand.u32 2147483647, %v986
        %vm997 = vcmp.eq.f32.partialorder %v996, 8.507059e+37
        %v998 = vand.u32 %v986, 2147483648
        %v999 = vor.u32 1.1754944e-38, %v998
        %v1000 = vsel %vm997, %v999, %v995
        %v1001 = vmul.f32 %v976, %v1000
        %v1002 = vmin.f32 %v1001, 1.0
        %v1003 = vmax.f32 %v1002, -1.0
        %v1004 = vadd.f32 %v883, 1.0
        %v1005 = vadd.f32 %v923, 1.0
        %v1006 = vadd.f32 %v963, 1.0
        %v1007 = vadd.f32 %v1003, 1.0
        %v1008 = vmul.f32 %v836, %v1004
        %v1009 = vmul.f32 %v837, %v1005
        %v1010 = vmul.f32 %v838, %v1006
        %v1011 = vmul.f32 %v839, %v1007
        %v1012 = vld [vmem:[%s437] sm:$0x1]
        %v1013 = vld [vmem:[%s440] sm:$0x1]
        %v1014 = vadd.f32 %v1008, %v1009
        %v1015 = vadd.f32 %v1014, %v1010
        %v1016 = vadd.f32 %v1015, %v1011
        %v1017 = vrot.slane %v1016, 4
        %v1018 = vadd.f32 %v1016, %v1017
        %v1019 = vrot.slane %v1018, 2
        %v1020 = vadd.f32 %v1018, %v1019
        %v1021 = vrot.slane %v1020, 1
        %v1022 = vadd.f32 %v1020, %v1021
        %v1023 = vmul.f32 %v1022, 0.03125
        %v1024 = vmul.f32 %v1008, %v1008
        %v1025 = vmul.f32 %v1009, %v1009
        %v1026 = vmul.f32 %v1010, %v1010
        %v1027 = vmul.f32 %v1011, %v1011
        %v1028 = vadd.f32 %v1024, %v1025
        %v1029 = vadd.f32 %v1028, %v1026
        %v1030 = vadd.f32 %v1029, %v1027
        %v1031 = vrot.slane %v1030, 4
        %v1032 = vadd.f32 %v1030, %v1031
        %v1033 = vrot.slane %v1032, 2
        %v1034 = vadd.f32 %v1032, %v1033
        %v1035 = vrot.slane %v1034, 1
        %v1036 = vadd.f32 %v1034, %v1035
        %v1037 = vmul.f32 %v1036, 0.03125
        %v1038 = vmul.f32 %v1023, %v1023
        %v1039 = vsub.f32 %v1037, %v1038
        %v1040 = vmax.f32 %v1039, 0.0
        %v1041 = vsub.f32 %v1008, %v1023
        %v1042 = vsub.f32 %v1009, %v1023
        %v1043 = vsub.f32 %v1010, %v1023
        %v1044 = vsub.f32 %v1011, %v1023
        %v1045 = vadd.f32 %v1040, 1e-05
        %v1046 = vrsqrt.pop %v1045
        %v1047 = vmul.f32 %v1046, %v1045
        %v1048 = vmul.f32 %v1047, %v1046
        %v1049 = vmul.f32 0.5, %v1048
        %v1050 = vsub.f32 1.5, %v1049
        %v1051 = vmul.f32 %v1046, %v1050
        %vm1052 = vweird.f32 %v1045
        %vm1053 = vweird.f32 %v1046
        %vm1054 = vmor %vm1052, %vm1053
        %v1055 = vsel %vm1054, %v1046, %v1051
        %v1056 = vmul.f32 %v1041, %v1055
        %v1057 = vmul.f32 %v1042, %v1055
        %v1058 = vmul.f32 %v1043, %v1055
        %v1059 = vmul.f32 %v1044, %v1055
        %v1061 = vperm.slane %v1012, 0
        %v1063 = vmul.f32 %v1056, %v1061
        %v1064 = vmul.f32 %v1057, %v1061
        %v1065 = vmul.f32 %v1058, %v1061
        %v1066 = vmul.f32 %v1059, %v1061
        %v1068 = vperm.slane %v1013, 0
        %v1070 = vadd.f32 %v1063, %v1068
        %v1071 = vadd.f32 %v1064, %v1068
        %v1072 = vadd.f32 %v1065, %v1068
        %v1073 = vadd.f32 %v1066, %v1068
        %p1074 = scmp.ne.s32.totalorder %s23, 1
        // Predicated region
        $region65: #{convmixer_autoencoder_forward.6} parent=55 // pred_check
          %p1075 = pneg %p1074
        $region66: #{convmixer_autoencoder_forward.6} parent=55 // pred_check_branch
          %1077 = sbr.rel (%p1075) target = $region68
        $region67: #{convmixer_autoencoder_forward.6} parent=55 // pred_region
          %1078 = vst [vmem:[#allocation2 + $0x1] sm:$0xff] %v1070
          %1079 = vst [vmem:[#allocation2 + $0x9] sm:$0xff] %v1071
          %1080 = vst [vmem:[#allocation2 + $0x19] sm:$0xff] %v1072
          %1081 = vst [vmem:[#allocation2 + $0x21] sm:$0xff] %v1073
        $region68: #{convmixer_autoencoder_forward.6} parent=55 // pred_fallthru
          _
        %p1082 = scmp.eq.s32.totalorder %s23, 1
        // Predicated region
        $region69: #{convmixer_autoencoder_forward.6} parent=55 // pred_check
          %p1083 = pneg %p1082
        $region70: #{convmixer_autoencoder_forward.6} parent=55 // pred_check_branch
          %1085 = sbr.rel (%p1083) target = $region72
        $region71: #{convmixer_autoencoder_forward.6} parent=55 // pred_region
          %1086 = vst [vmem:[%s9] sm:$0xff] %v1070
          %1087 = vst [vmem:[%s9 + $0x8] sm:$0xff] %v1071
          %1088 = vst [vmem:[%s9 + $0x10] sm:$0xff] %v1072
          %1089 = vst [vmem:[%s9 + $0x18] sm:$0xff] %v1073
        $region72: #{convmixer_autoencoder_forward.6} parent=55 // pred_fallthru
          _
        // Predicated region
        $region73: #{convmixer_autoencoder_forward.6} parent=55 // pred_check
          %p1090 = pneg %p265
        $region74: #{convmixer_autoencoder_forward.6} parent=55 // pred_check_branch
          %1092 = sbr.rel (%p1090) target = $region76
        $region75: #{convmixer_autoencoder_forward.6} parent=55 // pred_region
          _
        $region76: #{convmixer_autoencoder_forward.6} parent=55 // pred_fallthru
          _
        // Predicated region
        $region77: #{convmixer_autoencoder_forward.6} parent=55 // pred_check
          %p1093 = pneg %p265
        $region78: #{convmixer_autoencoder_forward.6} parent=55 // pred_check_branch
          %1095 = sbr.rel (%p1093) target = $region80
        $region79: #{convmixer_autoencoder_forward.6} parent=55 // pred_region
          _
        $region80: #{convmixer_autoencoder_forward.6} parent=55 // pred_fallthru
          _
      $region56: #{convmixer_autoencoder_forward.6} parent=5 // pred_fallthru
        _
      %p1096 = scmp.le.s32.totalorder 2, %s18
      // Predicated region
      $region81: #{convmixer_autoencoder_forward.6} parent=5 // pred_check
        %p1097 = pneg %p1096
      $region82: #{convmixer_autoencoder_forward.6} parent=5 // pred_check_branch
        %1099 = sbr.rel (%p1097) target = $region84
      $region83: #{convmixer_autoencoder_forward.6} parent=5 // pred_region
        %s1100 = ssub.s32 %s18, 2
      $region84: #{convmixer_autoencoder_forward.6} parent=5 // pred_fallthru
        _
    $region6: #{convmixer_autoencoder_forward.6} parent=1 // loop_footer
      %s22 = sadd.s32 1, %s18
    $region7: #{convmixer_autoencoder_forward.6} parent=1 // loop_footer_branch
      %17 = sbr.rel target = $region3
    $region8: #{convmixer_autoencoder_forward.6} parent=1 // loop_exit
      _
    %1101 = vsyncpa [#allocation4], 1
    %s1102 = scalar_lea.sflag [#allocation4], 1
    %1103 = vsyncpa %s1102, 1

</llo_original>
